<compile_context>
chip_gen: v6e
topology: v6e:2x2x1
jax: 0.10.0
libtpu: 0.0.40
codegen_flags: <defaults>
</compile_context>

<pallas_src>
import numpy as np
import jax
import jax.numpy as jnp
from jax.experimental import pallas as pl
from jax.experimental.pallas import tpu as pltpu


def _round_up(a, b):
    return (a + b - 1) // b * b


def _padded_vmem_bytes_per_sample(H, W, K, in_dtype):
    """Per-sample VMEM footprint inside the kernel's blocks, including
    (sublane, lane) tile padding.  Input tile: (H, W) in native dtype
    (sub-32-bit dtypes pack along sublanes); output: one f32 row of K lanes."""
    item = jnp.dtype(in_dtype).itemsize
    sublane = {1: 32, 2: 16}.get(item, 8)
    in_bytes = _round_up(H, sublane) * _round_up(W, 128) * item
    out_bytes = _round_up(K, 128) * 4
    return in_bytes + out_bytes


def _pick_block_b(N, per_sample_bytes, max_tb=512, vmem_budget=12 << 20):
    """Samples per grid step: as many as the double-buffered, padding-aware
    VMEM budget allows (capped at max_tb), a multiple of 8, balanced across
    steps so batch padding stays < 8 samples per step."""
    cap = max(8, min(max_tb, vmem_budget // (2 * max(per_sample_bytes, 1))))
    num_steps = -(-N // cap)
    return _round_up(-(-N // num_steps), 8)


def _make_crop_kernel(H, W, Ht, Wt, TB, even_h, even_w):
    K = Ht * Wt
    n_groups = TB // 8

    def taps(base, v0, even):
        # base holds (actual_index - output_index); the tap hits where it
        # equals the integer window start v0 (and v0+1 for the 0.5/0.5 case).
        if even:
            hit = (base == v0) | (base == v0 + 1)
            return jnp.where(hit, jnp.float32(0.5), jnp.float32(0.0))
        return jnp.where(base == v0, jnp.float32(1.0), jnp.float32(0.0))

    def kernel(xy_ref, base_yk_ref, sel_ref, in_ref, out_ref):
        # xy_ref:      SMEM int32 (2*N_pad,)  flattened [x0_0, y0_0, x0_1, ...]
        # base_yk_ref: (H, K) int32   base_yk[h, k] = h - k // Wt   (host table)
        # sel_ref:     (Wt, K) f32    sel[j, k]     = 1.0 iff k % Wt == j
        # in_ref:      (TB, H, W)     native input dtype
        # out_ref:     (TB//8, 8, K)  f32, lane-dense flat rows
        g = pl.program_id(0)

        base_yk = base_yk_ref[...]
        sel = sel_ref[...]

        # Hoisted per-step constants (amortized over TB samples).
        w_i = jax.lax.broadcasted_iota(jnp.int32, (Wt, W), 1)
        j_i = jax.lax.broadcasted_iota(jnp.int32, (Wt, W), 0)
        base_x = w_i - j_i                                   # (Wt, W)
        r_i = jax.lax.broadcasted_iota(jnp.int32, (8, H), 0)
        onehots = [jnp.where(r_i == r, jnp.float32(1.0), jnp.float32(0.0))
                   for r in range(8)]                        # each (8, H)

        def group(grp, carry):
            acc = jnp.zeros((8, K), jnp.float32)
            for r in range(8):           # static: r is the output sublane
                t = grp * 8 + r
                b = g * TB + t
                x0 = xy_ref[2 * b]
                y0 = xy_ref[2 * b + 1]

                wx = taps(base_x, x0, even_w)       # (Wt, W)  x tap weights
                wyk = taps(base_yk, y0, even_h)     # (H, K)   y taps, flat-k layout

                img = in_ref[t].astype(jnp.float32)             # (H, W)
                # x interpolation: t2[h, j] = sum_w img[h, w] * wx[j, w]
                t2 = jax.lax.dot_general(
                    img, wx, (((1,), (1,)), ((), ())),
                    preferred_element_type=jnp.float32)         # (H, Wt)
                # lane-expand to flat output index k = i*Wt + j
                t2k = jnp.dot(t2, sel,
                              preferred_element_type=jnp.float32)  # (H, K)
                # y interpolation fused with "place row into sublane r" (MXU).
                acc = acc + jnp.dot(onehots[r], wyk * t2k,
                                    preferred_element_type=jnp.float32)
            out_ref[grp] = jnp.round(acc)           # one dense (8, K) store
            return carry

        jax.lax.fori_loop(0, n_groups, group, 0)

    return kernel


def crop_pallas(inputs, coordinates, height, width, height_target, width_target,
                block_b=None):
    """Pallas equivalent of Crop.forward(inputs, coordinates)."""
    squeeze_channel = False
    if inputs.ndim == 3:
        inputs = inputs[:, None, :, :]
    B, C, H, W = inputs.shape
    assert H == height, "expected %d but found %d" % (height, H)
    assert W == width, "expected %d but found %d" % (width, W)
    Ht, Wt = height_target, width_target
    K = Ht * Wt
    squeeze_channel = (C == 1)  # mirrors torch .squeeze(1)

    # TODO(synk): non-integer crop centers (general bilinear) are not supported;
    # the module only ever receives integer x,y tile coordinates.
    assert jnp.issubdtype(coordinates.dtype, jnp.integer), "integer coordinates only"

    # Keep narrow dtypes end-to-end (int16/int8/bf16 halve/quarter HBM + VMEM);
    # only guard against 64-bit which TPUs dislike.
    if inputs.dtype == jnp.float64:
        inputs = inputs.astype(jnp.float32)
    elif inputs.dtype == jnp.int64:
        inputs = inputs.astype(jnp.int32)

    # Fold channels into the batch axis: one (H, W) image per kernel sample.
    N = B * C
    imgs = inputs.reshape(N, H, W)

    # Integer window starts (floor of the first bilinear tap), exact in int32.
    x0 = coordinates[:, 0].astype(jnp.int32) - (Wt // 2) - (1 if W % 2 == 0 else 0)
    y0 = coordinates[:, 1].astype(jnp.int32) - (Ht // 2) - (1 if H % 2 == 0 else 0)
    if C > 1:
        x0 = jnp.repeat(x0, C)
        y0 = jnp.repeat(y0, C)
    xy = jnp.stack([x0, y0], axis=1)                        # (N, 2)

    per_sample = _padded_vmem_bytes_per_sample(H, W, K, imgs.dtype)
    if block_b is None:
        TB = _pick_block_b(N, per_sample)
    else:
        assert block_b % 8 == 0, "block_b must be a multiple of 8"
        TB = block_b

    N_pad = _round_up(N, TB)
    G = N_pad // TB
    if N_pad > N:                                           # zero-pad partial last block
        imgs = jnp.pad(imgs, ((0, N_pad - N), (0, 0), (0, 0)))
        xy = jnp.pad(xy, ((0, N_pad - N), (0, 0)))
    xy = xy.reshape(-1)                                     # (2*N_pad,) for SMEM prefetch

    # Tiny static index tables (host-side, avoids in-kernel vector int div/mod).
    ks = np.arange(K)
    base_yk = jnp.asarray((np.arange(H)[:, None] - (ks // Wt)[None, :]).astype(np.int32))
    sel = jnp.asarray((ks[None, :] % Wt == np.arange(Wt)[:, None]).astype(np.float32))

    kernel = _make_crop_kernel(H, W, Ht, Wt, TB, H % 2 == 0, W % 2 == 0)

    out = pl.pallas_call(
        kernel,
        out_shape=jax.ShapeDtypeStruct((N_pad // 8, 8, K), jnp.float32),
        grid_spec=pltpu.PrefetchScalarGridSpec(
            num_scalar_prefetch=1,                          # crop centers in SMEM
            grid=(G,),
            in_specs=[
                pl.BlockSpec((H, K), lambda g, xy: (0, 0)),       # base_yk (fetched once)
                pl.BlockSpec((Wt, K), lambda g, xy: (0, 0)),      # sel      (fetched once)
                pl.BlockSpec((TB, H, W), lambda g, xy: (g, 0, 0)),
            ],
            out_specs=pl.BlockSpec((TB // 8, 8, K), lambda g, xy: (g, 0, 0)),
        ),
        compiler_params=pltpu.CompilerParams(
            dimension_semantics=("parallel",),              # batch blocks independent
            vmem_limit_bytes=32 * 1024 * 1024),
    )(xy, base_yk, sel, imgs)

    out = out.reshape(N_pad, K)[:N].reshape(B, C, Ht, Wt)
    if squeeze_channel:
        out = out[:, 0]
    return out


def crop_reference(inputs, coordinates, height, width, height_target, width_target):
    """Pure-JAX reference: direct bilinear gather with grid_sample semantics."""
    if inputs.ndim == 3:
        inputs = inputs[:, None, :, :]
    inputs = inputs.astype(jnp.float32)
    B, C, H, W = inputs.shape
    Ht, Wt = height_target, width_target
    const_x = (W - 1) / 2.0 - (W // 2) - (Wt // 2)
    const_y = (H - 1) / 2.0 - (H // 2) - (Ht // 2)
    x = coordinates[:, 0].astype(jnp.float32)
    y = coordinates[:, 1].astype(jnp.float32)
    j = jnp.arange(Wt, dtype=jnp.float32)
    i = jnp.arange(Ht, dtype=jnp.float32)
    ix = jnp.broadcast_to(x[:, None, None] + j[None, None, :] + const_x, (B, Ht, Wt))
    iy = jnp.broadcast_to(y[:, None, None] + i[None, :, None] + const_y, (B, Ht, Wt))
    x0 = jnp.floor(ix)
    y0 = jnp.floor(iy)
    fx = ix - x0
    fy = iy - y0

    def corner(y_idx, x_idx, wgt):
        yi = y_idx.astype(jnp.int32)
        xi = x_idx.astype(jnp.int32)
        valid = (yi >= 0) & (yi < H) & (xi >= 0) & (xi < W)
        yc = jnp.clip(yi, 0, H - 1)
        xc = jnp.clip(xi, 0, W - 1)
        vals = jax.vmap(lambda img, yy, xx: img[:, yy, xx])(inputs, yc, xc)  # (B,C,Ht,Wt)
        return jnp.where(valid[:, None], vals, 0.0) * wgt[:, None]

    out = (corner(y0, x0, (1 - fy) * (1 - fx))
           + corner(y0, x0 + 1, (1 - fy) * fx)
           + corner(y0 + 1, x0, fy * (1 - fx))
           + corner(y0 + 1, x0 + 1, fy * fx))
    out = jnp.round(out)
    if C == 1:
        out = out[:, 0]
    return out


if __name__ == "__main__":
    key = jax.random.PRNGKey(0)
    ks = jax.random.split(key, 9)

    # Case 1: 3-D int16 input (glyph-like), even H/W -> 0.5/0.5 two-tap blending,
    #         squeeze(1) path.
    B1, H1, W1, Ht1, Wt1 = 8, 16, 16, 8, 8
    inp1 = jax.random.randint(ks[0], (B1, H1, W1), 0, 60).astype(jnp.int16)
    coords1 = jnp.stack([jax.random.randint(ks[1], (B1,), 0, W1),
                         jax.random.randint(ks[2], (B1,), 0, H1)], axis=1).astype(jnp.int32)
    out1 = jax.block_until_ready(crop_pallas(inp1, coords1, H1, W1, Ht1, Wt1))
    ref1 = crop_reference(inp1, coords1, H1, W1, Ht1, Wt1)
    assert out1.shape == (B1, Ht1, Wt1), out1.shape
    assert out1.dtype == jnp.float32
    if not bool(jnp.allclose(out1, ref1, atol=1e-5)):
        raise AssertionError("Pallas crop (case 1) does not match reference")

    # Case 2: 4-D float input, C=2, odd H/W -> one-hot taps, no squeeze.
    B2, C2, H2, W2, Ht2, Wt2 = 4, 2, 21, 31, 9, 9
    inp2 = jax.random.uniform(ks[3], (B2, C2, H2, W2), jnp.float32, 0.0, 10.0)
    coords2 = jnp.stack([jax.random.randint(ks[4], (B2,), 0, W2),
                         jax.random.randint(ks[5], (B2,), 0, H2)], axis=1).astype(jnp.int32)
    out2 = jax.block_until_ready(crop_pallas(inp2, coords2, H2, W2, Ht2, Wt2))
    ref2 = crop_reference(inp2, coords2, H2, W2, Ht2, Wt2)
    assert out2.shape == (B2, C2, Ht2, Wt2), out2.shape
    assert out2.dtype == jnp.float32
    if not bool(jnp.allclose(out2, ref2, atol=1e-5)):
        raise AssertionError("Pallas crop (case 2) does not match reference")

    # Case 3: real NetHack dungeon shape (21 x 79), int16 glyphs, forced small
    #         block to exercise the multi-step grid + batch-padding path
    #         (N=20 -> N_pad=24, 3 grid steps of TB=8).
    B3, H3, W3, Ht3, Wt3 = 20, 21, 79, 9, 9
    inp3 = jax.random.randint(ks[6], (B3, H3, W3), 0, 6000).astype(jnp.int16)
    coords3 = jnp.stack([jax.random.randint(ks[7], (B3,), 0, W3),
                         jax.random.randint(ks[8], (B3,), 0, H3)], axis=1).astype(jnp.int32)
    out3 = jax.block_until_ready(
        crop_pallas(inp3, coords3, H3, W3, Ht3, Wt3, block_b=8))
    ref3 = crop_reference(inp3, coords3, H3, W3, Ht3, Wt3)
    assert out3.shape == (B3, Ht3, Wt3), out3.shape
    assert out3.dtype == jnp.float32
    if not bool(jnp.allclose(out3, ref3, atol=1e-5)):
        raise AssertionError("Pallas crop (case 3) does not match reference")

    print("KERNEL_OK")
</pallas_src>

<mosaic_0001>
module attributes {stable_mosaic.version = 11 : i64} {
  func.func @kernel(%arg0: i32, %arg1: memref<16xi32, #tpu.memory_space<smem>>, %arg2: memref<16x64xi32, #tpu.memory_space<vmem>>, %arg3: memref<8x64xf32, #tpu.memory_space<vmem>>, %arg4: memref<8x16x16xi16, #tpu.memory_space<vmem>>, %arg5: memref<1x8x64xf32, #tpu.memory_space<vmem>>) attributes {dimension_semantics = [#tpu.dimension_semantics<parallel>], iteration_bounds = array<i64: 1>, scalar_prefetch = 1 : i64, scratch_operands = 0 : i64, tpu.core_type = #tpu.core_type<tc>, window_params = [{pipeline_mode = #tpu.pipeline_mode<synchronous>, transform_indices = @transform_0, window_bounds = array<i64: 16, 64>}, {pipeline_mode = #tpu.pipeline_mode<synchronous>, transform_indices = @transform_1, window_bounds = array<i64: 8, 64>}, {transform_indices = @transform_2, window_bounds = array<i64: 8, 16, 16>}, {transform_indices = @transform_3, window_bounds = array<i64: 1, 8, 64>}]} {
    %c0 = arith.constant 0 : index
    %c0_0 = arith.constant 0 : index
    %0 = vector.load %arg2[%c0, %c0_0] : memref<16x64xi32, #tpu.memory_space<vmem>>, vector<16x64xi32>
    %c0_1 = arith.constant 0 : index
    %c0_2 = arith.constant 0 : index
    %1 = vector.load %arg3[%c0_1, %c0_2] : memref<8x64xf32, #tpu.memory_space<vmem>>, vector<8x64xf32>
    %2 = tpu.iota {dimensions = array<i32: 1>} : vector<8x16xi32>
    %3 = tpu.iota {dimensions = array<i32: 0>} : vector<8x16xi32>
    %4 = arith.subi %2, %3 : vector<8x16xi32>
    %5 = tpu.iota {dimensions = array<i32: 0>} : vector<8x16xi32>
    %c0_i32 = arith.constant 0 : i32
    %6 = vector.broadcast %c0_i32 : i32 to vector<8x16xi32>
    %7 = arith.cmpi eq, %5, %6 : vector<8x16xi32>
    %cst = arith.constant 1.000000e+00 : f32
    %cst_3 = arith.constant 0.000000e+00 : f32
    %8 = vector.broadcast %cst : f32 to vector<8x16xf32>
    %9 = vector.broadcast %cst_3 : f32 to vector<8x16xf32>
    %10 = arith.select %7, %8, %9 : vector<8x16xi1>, vector<8x16xf32>
    %c1_i32 = arith.constant 1 : i32
    %11 = vector.broadcast %c1_i32 : i32 to vector<8x16xi32>
    %12 = arith.cmpi eq, %5, %11 : vector<8x16xi32>
    %cst_4 = arith.constant 1.000000e+00 : f32
    %cst_5 = arith.constant 0.000000e+00 : f32
    %13 = vector.broadcast %cst_4 : f32 to vector<8x16xf32>
    %14 = vector.broadcast %cst_5 : f32 to vector<8x16xf32>
    %15 = arith.select %12, %13, %14 : vector<8x16xi1>, vector<8x16xf32>
    %c2_i32 = arith.constant 2 : i32
    %16 = vector.broadcast %c2_i32 : i32 to vector<8x16xi32>
    %17 = arith.cmpi eq, %5, %16 : vector<8x16xi32>
    %cst_6 = arith.constant 1.000000e+00 : f32
    %cst_7 = arith.constant 0.000000e+00 : f32
    %18 = vector.broadcast %cst_6 : f32 to vector<8x16xf32>
    %19 = vector.broadcast %cst_7 : f32 to vector<8x16xf32>
    %20 = arith.select %17, %18, %19 : vector<8x16xi1>, vector<8x16xf32>
    %c3_i32 = arith.constant 3 : i32
    %21 = vector.broadcast %c3_i32 : i32 to vector<8x16xi32>
    %22 = arith.cmpi eq, %5, %21 : vector<8x16xi32>
    %cst_8 = arith.constant 1.000000e+00 : f32
    %cst_9 = arith.constant 0.000000e+00 : f32
    %23 = vector.broadcast %cst_8 : f32 to vector<8x16xf32>
    %24 = vector.broadcast %cst_9 : f32 to vector<8x16xf32>
    %25 = arith.select %22, %23, %24 : vector<8x16xi1>, vector<8x16xf32>
    %c4_i32 = arith.constant 4 : i32
    %26 = vector.broadcast %c4_i32 : i32 to vector<8x16xi32>
    %27 = arith.cmpi eq, %5, %26 : vector<8x16xi32>
    %cst_10 = arith.constant 1.000000e+00 : f32
    %cst_11 = arith.constant 0.000000e+00 : f32
    %28 = vector.broadcast %cst_10 : f32 to vector<8x16xf32>
    %29 = vector.broadcast %cst_11 : f32 to vector<8x16xf32>
    %30 = arith.select %27, %28, %29 : vector<8x16xi1>, vector<8x16xf32>
    %c5_i32 = arith.constant 5 : i32
    %31 = vector.broadcast %c5_i32 : i32 to vector<8x16xi32>
    %32 = arith.cmpi eq, %5, %31 : vector<8x16xi32>
    %cst_12 = arith.constant 1.000000e+00 : f32
    %cst_13 = arith.constant 0.000000e+00 : f32
    %33 = vector.broadcast %cst_12 : f32 to vector<8x16xf32>
    %34 = vector.broadcast %cst_13 : f32 to vector<8x16xf32>
    %35 = arith.select %32, %33, %34 : vector<8x16xi1>, vector<8x16xf32>
    %c6_i32 = arith.constant 6 : i32
    %36 = vector.broadcast %c6_i32 : i32 to vector<8x16xi32>
    %37 = arith.cmpi eq, %5, %36 : vector<8x16xi32>
    %cst_14 = arith.constant 1.000000e+00 : f32
    %cst_15 = arith.constant 0.000000e+00 : f32
    %38 = vector.broadcast %cst_14 : f32 to vector<8x16xf32>
    %39 = vector.broadcast %cst_15 : f32 to vector<8x16xf32>
    %40 = arith.select %37, %38, %39 : vector<8x16xi1>, vector<8x16xf32>
    %c7_i32 = arith.constant 7 : i32
    %41 = vector.broadcast %c7_i32 : i32 to vector<8x16xi32>
    %42 = arith.cmpi eq, %5, %41 : vector<8x16xi32>
    %cst_16 = arith.constant 1.000000e+00 : f32
    %cst_17 = arith.constant 0.000000e+00 : f32
    %43 = vector.broadcast %cst_16 : f32 to vector<8x16xf32>
    %44 = vector.broadcast %cst_17 : f32 to vector<8x16xf32>
    %45 = arith.select %42, %43, %44 : vector<8x16xi1>, vector<8x16xf32>
    %c0_i32_18 = arith.constant 0 : i32
    %cst_19 = arith.constant 0.000000e+00 : f32
    %46 = vector.broadcast %cst_19 : f32 to vector<8x64xf32>
    %c8_i32 = arith.constant 8 : i32
    %47 = arith.muli %c0_i32_18, %c8_i32 : i32
    %c0_i32_20 = arith.constant 0 : i32
    %48 = arith.addi %47, %c0_i32_20 : i32
    %c8_i32_21 = arith.constant 8 : i32
    %49 = arith.muli %arg0, %c8_i32_21 : i32
    %50 = arith.addi %49, %48 : i32
    %c2_i32_22 = arith.constant 2 : i32
    %51 = arith.muli %c2_i32_22, %50 : i32
    %52 = arith.index_cast %51 : i32 to index
    %53 = memref.load %arg1[%52] : memref<16xi32, #tpu.memory_space<smem>>
    %c2_i32_23 = arith.constant 2 : i32
    %54 = arith.muli %c2_i32_23, %50 : i32
    %c1_i32_24 = arith.constant 1 : i32
    %55 = arith.addi %54, %c1_i32_24 : i32
    %56 = arith.index_cast %55 : i32 to index
    %57 = memref.load %arg1[%56] : memref<16xi32, #tpu.memory_space<smem>>
    %58 = vector.broadcast %53 : i32 to vector<8x16xi32>
    %59 = arith.cmpi eq, %4, %58 : vector<8x16xi32>
    %c1_i32_25 = arith.constant 1 : i32
    %60 = arith.addi %53, %c1_i32_25 : i32
    %61 = vector.broadcast %60 : i32 to vector<8x16xi32>
    %62 = arith.cmpi eq, %4, %61 : vector<8x16xi32>
    %63 = arith.ori %59, %62 : vector<8x16xi1>
    %cst_26 = arith.constant 5.000000e-01 : f32
    %cst_27 = arith.constant 0.000000e+00 : f32
    %64 = vector.broadcast %cst_26 : f32 to vector<8x16xf32>
    %65 = vector.broadcast %cst_27 : f32 to vector<8x16xf32>
    %66 = arith.select %63, %64, %65 : vector<8x16xi1>, vector<8x16xf32>
    %67 = vector.broadcast %57 : i32 to vector<16x64xi32>
    %68 = arith.cmpi eq, %0, %67 : vector<16x64xi32>
    %c1_i32_28 = arith.constant 1 : i32
    %69 = arith.addi %57, %c1_i32_28 : i32
    %70 = vector.broadcast %69 : i32 to vector<16x64xi32>
    %71 = arith.cmpi eq, %0, %70 : vector<16x64xi32>
    %72 = arith.ori %68, %71 : vector<16x64xi1>
    %cst_29 = arith.constant 5.000000e-01 : f32
    %cst_30 = arith.constant 0.000000e+00 : f32
    %73 = vector.broadcast %cst_29 : f32 to vector<16x64xf32>
    %74 = vector.broadcast %cst_30 : f32 to vector<16x64xf32>
    %75 = arith.select %72, %73, %74 : vector<16x64xi1>, vector<16x64xf32>
    %76 = arith.index_cast %48 : i32 to index
    %c0_31 = arith.constant 0 : index
    %c0_32 = arith.constant 0 : index
    %77 = vector.load %arg4[%76, %c0_31, %c0_32] : memref<8x16x16xi16, #tpu.memory_space<vmem>>, vector<1x16x16xi16>
    %78 = vector.shape_cast %77 : vector<1x16x16xi16> to vector<16x16xi16>
    %79 = arith.sitofp %78 : vector<16x16xi16> to vector<16x16xf32>
    %cst_33 = arith.constant dense<0.000000e+00> : vector<16x8xf32>
    %80 = tpu.matmul %79, %66, %cst_33 {dimension_numbers = #tpu.dot_dimension_numbers<[1], [1], [0], [0], [0, 0, 1, 0], [], []>} : vector<16x16xf32>, vector<8x16xf32>, vector<16x8xf32> -> vector<16x8xf32>
    %cst_34 = arith.constant dense<0.000000e+00> : vector<16x64xf32>
    %81 = tpu.matmul %80, %1, %cst_34 {dimension_numbers = #tpu.dot_dimension_numbers<[1], [0], [0], [1], [0, 0, 1, 1], [], []>} : vector<16x8xf32>, vector<8x64xf32>, vector<16x64xf32> -> vector<16x64xf32>
    %82 = arith.mulf %75, %81 : vector<16x64xf32>
    %cst_35 = arith.constant dense<0.000000e+00> : vector<8x64xf32>
    %83 = tpu.matmul %10, %82, %cst_35 {dimension_numbers = #tpu.dot_dimension_numbers<[1], [0], [0], [1], [0, 0, 1, 1], [], []>} : vector<8x16xf32>, vector<16x64xf32>, vector<8x64xf32> -> vector<8x64xf32>
    %84 = arith.addf %46, %83 : vector<8x64xf32>
    %c8_i32_36 = arith.constant 8 : i32
    %85 = arith.muli %c0_i32_18, %c8_i32_36 : i32
    %c1_i32_37 = arith.constant 1 : i32
    %86 = arith.addi %85, %c1_i32_37 : i32
    %c8_i32_38 = arith.constant 8 : i32
    %87 = arith.muli %arg0, %c8_i32_38 : i32
    %88 = arith.addi %87, %86 : i32
    %c2_i32_39 = arith.constant 2 : i32
    %89 = arith.muli %c2_i32_39, %88 : i32
    %90 = arith.index_cast %89 : i32 to index
    %91 = memref.load %arg1[%90] : memref<16xi32, #tpu.memory_space<smem>>
    %c2_i32_40 = arith.constant 2 : i32
    %92 = arith.muli %c2_i32_40, %88 : i32
    %c1_i32_41 = arith.constant 1 : i32
    %93 = arith.addi %92, %c1_i32_41 : i32
    %94 = arith.index_cast %93 : i32 to index
    %95 = memref.load %arg1[%94] : memref<16xi32, #tpu.memory_space<smem>>
    %96 = vector.broadcast %91 : i32 to vector<8x16xi32>
    %97 = arith.cmpi eq, %4, %96 : vector<8x16xi32>
    %c1_i32_42 = arith.constant 1 : i32
    %98 = arith.addi %91, %c1_i32_42 : i32
    %99 = vector.broadcast %98 : i32 to vector<8x16xi32>
    %100 = arith.cmpi eq, %4, %99 : vector<8x16xi32>
    %101 = arith.ori %97, %100 : vector<8x16xi1>
    %cst_43 = arith.constant 5.000000e-01 : f32
    %cst_44 = arith.constant 0.000000e+00 : f32
    %102 = vector.broadcast %cst_43 : f32 to vector<8x16xf32>
    %103 = vector.broadcast %cst_44 : f32 to vector<8x16xf32>
    %104 = arith.select %101, %102, %103 : vector<8x16xi1>, vector<8x16xf32>
    %105 = vector.broadcast %95 : i32 to vector<16x64xi32>
    %106 = arith.cmpi eq, %0, %105 : vector<16x64xi32>
    %c1_i32_45 = arith.constant 1 : i32
    %107 = arith.addi %95, %c1_i32_45 : i32
    %108 = vector.broadcast %107 : i32 to vector<16x64xi32>
    %109 = arith.cmpi eq, %0, %108 : vector<16x64xi32>
    %110 = arith.ori %106, %109 : vector<16x64xi1>
    %cst_46 = arith.constant 5.000000e-01 : f32
    %cst_47 = arith.constant 0.000000e+00 : f32
    %111 = vector.broadcast %cst_46 : f32 to vector<16x64xf32>
    %112 = vector.broadcast %cst_47 : f32 to vector<16x64xf32>
    %113 = arith.select %110, %111, %112 : vector<16x64xi1>, vector<16x64xf32>
    %114 = arith.index_cast %86 : i32 to index
    %c0_48 = arith.constant 0 : index
    %c0_49 = arith.constant 0 : index
    %115 = vector.load %arg4[%114, %c0_48, %c0_49] : memref<8x16x16xi16, #tpu.memory_space<vmem>>, vector<1x16x16xi16>
    %116 = vector.shape_cast %115 : vector<1x16x16xi16> to vector<16x16xi16>
    %117 = arith.sitofp %116 : vector<16x16xi16> to vector<16x16xf32>
    %cst_50 = arith.constant dense<0.000000e+00> : vector<16x8xf32>
    %118 = tpu.matmul %117, %104, %cst_50 {dimension_numbers = #tpu.dot_dimension_numbers<[1], [1], [0], [0], [0, 0, 1, 0], [], []>} : vector<16x16xf32>, vector<8x16xf32>, vector<16x8xf32> -> vector<16x8xf32>
    %cst_51 = arith.constant dense<0.000000e+00> : vector<16x64xf32>
    %119 = tpu.matmul %118, %1, %cst_51 {dimension_numbers = #tpu.dot_dimension_numbers<[1], [0], [0], [1], [0, 0, 1, 1], [], []>} : vector<16x8xf32>, vector<8x64xf32>, vector<16x64xf32> -> vector<16x64xf32>
    %120 = arith.mulf %113, %119 : vector<16x64xf32>
    %cst_52 = arith.constant dense<0.000000e+00> : vector<8x64xf32>
    %121 = tpu.matmul %15, %120, %cst_52 {dimension_numbers = #tpu.dot_dimension_numbers<[1], [0], [0], [1], [0, 0, 1, 1], [], []>} : vector<8x16xf32>, vector<16x64xf32>, vector<8x64xf32> -> vector<8x64xf32>
    %122 = arith.addf %84, %121 : vector<8x64xf32>
    %c8_i32_53 = arith.constant 8 : i32
    %123 = arith.muli %c0_i32_18, %c8_i32_53 : i32
    %c2_i32_54 = arith.constant 2 : i32
    %124 = arith.addi %123, %c2_i32_54 : i32
    %c8_i32_55 = arith.constant 8 : i32
    %125 = arith.muli %arg0, %c8_i32_55 : i32
    %126 = arith.addi %125, %124 : i32
    %c2_i32_56 = arith.constant 2 : i32
    %127 = arith.muli %c2_i32_56, %126 : i32
    %128 = arith.index_cast %127 : i32 to index
    %129 = memref.load %arg1[%128] : memref<16xi32, #tpu.memory_space<smem>>
    %c2_i32_57 = arith.constant 2 : i32
    %130 = arith.muli %c2_i32_57, %126 : i32
    %c1_i32_58 = arith.constant 1 : i32
    %131 = arith.addi %130, %c1_i32_58 : i32
    %132 = arith.index_cast %131 : i32 to index
    %133 = memref.load %arg1[%132] : memref<16xi32, #tpu.memory_space<smem>>
    %134 = vector.broadcast %129 : i32 to vector<8x16xi32>
    %135 = arith.cmpi eq, %4, %134 : vector<8x16xi32>
    %c1_i32_59 = arith.constant 1 : i32
    %136 = arith.addi %129, %c1_i32_59 : i32
    %137 = vector.broadcast %136 : i32 to vector<8x16xi32>
    %138 = arith.cmpi eq, %4, %137 : vector<8x16xi32>
    %139 = arith.ori %135, %138 : vector<8x16xi1>
    %cst_60 = arith.constant 5.000000e-01 : f32
    %cst_61 = arith.constant 0.000000e+00 : f32
    %140 = vector.broadcast %cst_60 : f32 to vector<8x16xf32>
    %141 = vector.broadcast %cst_61 : f32 to vector<8x16xf32>
    %142 = arith.select %139, %140, %141 : vector<8x16xi1>, vector<8x16xf32>
    %143 = vector.broadcast %133 : i32 to vector<16x64xi32>
    %144 = arith.cmpi eq, %0, %143 : vector<16x64xi32>
    %c1_i32_62 = arith.constant 1 : i32
    %145 = arith.addi %133, %c1_i32_62 : i32
    %146 = vector.broadcast %145 : i32 to vector<16x64xi32>
    %147 = arith.cmpi eq, %0, %146 : vector<16x64xi32>
    %148 = arith.ori %144, %147 : vector<16x64xi1>
    %cst_63 = arith.constant 5.000000e-01 : f32
    %cst_64 = arith.constant 0.000000e+00 : f32
    %149 = vector.broadcast %cst_63 : f32 to vector<16x64xf32>
    %150 = vector.broadcast %cst_64 : f32 to vector<16x64xf32>
    %151 = arith.select %148, %149, %150 : vector<16x64xi1>, vector<16x64xf32>
    %152 = arith.index_cast %124 : i32 to index
    %c0_65 = arith.constant 0 : index
    %c0_66 = arith.constant 0 : index
    %153 = vector.load %arg4[%152, %c0_65, %c0_66] : memref<8x16x16xi16, #tpu.memory_space<vmem>>, vector<1x16x16xi16>
    %154 = vector.shape_cast %153 : vector<1x16x16xi16> to vector<16x16xi16>
    %155 = arith.sitofp %154 : vector<16x16xi16> to vector<16x16xf32>
    %cst_67 = arith.constant dense<0.000000e+00> : vector<16x8xf32>
    %156 = tpu.matmul %155, %142, %cst_67 {dimension_numbers = #tpu.dot_dimension_numbers<[1], [1], [0], [0], [0, 0, 1, 0], [], []>} : vector<16x16xf32>, vector<8x16xf32>, vector<16x8xf32> -> vector<16x8xf32>
    %cst_68 = arith.constant dense<0.000000e+00> : vector<16x64xf32>
    %157 = tpu.matmul %156, %1, %cst_68 {dimension_numbers = #tpu.dot_dimension_numbers<[1], [0], [0], [1], [0, 0, 1, 1], [], []>} : vector<16x8xf32>, vector<8x64xf32>, vector<16x64xf32> -> vector<16x64xf32>
    %158 = arith.mulf %151, %157 : vector<16x64xf32>
    %cst_69 = arith.constant dense<0.000000e+00> : vector<8x64xf32>
    %159 = tpu.matmul %20, %158, %cst_69 {dimension_numbers = #tpu.dot_dimension_numbers<[1], [0], [0], [1], [0, 0, 1, 1], [], []>} : vector<8x16xf32>, vector<16x64xf32>, vector<8x64xf32> -> vector<8x64xf32>
    %160 = arith.addf %122, %159 : vector<8x64xf32>
    %c8_i32_70 = arith.constant 8 : i32
    %161 = arith.muli %c0_i32_18, %c8_i32_70 : i32
    %c3_i32_71 = arith.constant 3 : i32
    %162 = arith.addi %161, %c3_i32_71 : i32
    %c8_i32_72 = arith.constant 8 : i32
    %163 = arith.muli %arg0, %c8_i32_72 : i32
    %164 = arith.addi %163, %162 : i32
    %c2_i32_73 = arith.constant 2 : i32
    %165 = arith.muli %c2_i32_73, %164 : i32
    %166 = arith.index_cast %165 : i32 to index
    %167 = memref.load %arg1[%166] : memref<16xi32, #tpu.memory_space<smem>>
    %c2_i32_74 = arith.constant 2 : i32
    %168 = arith.muli %c2_i32_74, %164 : i32
    %c1_i32_75 = arith.constant 1 : i32
    %169 = arith.addi %168, %c1_i32_75 : i32
    %170 = arith.index_cast %169 : i32 to index
    %171 = memref.load %arg1[%170] : memref<16xi32, #tpu.memory_space<smem>>
    %172 = vector.broadcast %167 : i32 to vector<8x16xi32>
    %173 = arith.cmpi eq, %4, %172 : vector<8x16xi32>
    %c1_i32_76 = arith.constant 1 : i32
    %174 = arith.addi %167, %c1_i32_76 : i32
    %175 = vector.broadcast %174 : i32 to vector<8x16xi32>
    %176 = arith.cmpi eq, %4, %175 : vector<8x16xi32>
    %177 = arith.ori %173, %176 : vector<8x16xi1>
    %cst_77 = arith.constant 5.000000e-01 : f32
    %cst_78 = arith.constant 0.000000e+00 : f32
    %178 = vector.broadcast %cst_77 : f32 to vector<8x16xf32>
    %179 = vector.broadcast %cst_78 : f32 to vector<8x16xf32>
    %180 = arith.select %177, %178, %179 : vector<8x16xi1>, vector<8x16xf32>
    %181 = vector.broadcast %171 : i32 to vector<16x64xi32>
    %182 = arith.cmpi eq, %0, %181 : vector<16x64xi32>
    %c1_i32_79 = arith.constant 1 : i32
    %183 = arith.addi %171, %c1_i32_79 : i32
    %184 = vector.broadcast %183 : i32 to vector<16x64xi32>
    %185 = arith.cmpi eq, %0, %184 : vector<16x64xi32>
    %186 = arith.ori %182, %185 : vector<16x64xi1>
    %cst_80 = arith.constant 5.000000e-01 : f32
    %cst_81 = arith.constant 0.000000e+00 : f32
    %187 = vector.broadcast %cst_80 : f32 to vector<16x64xf32>
    %188 = vector.broadcast %cst_81 : f32 to vector<16x64xf32>
    %189 = arith.select %186, %187, %188 : vector<16x64xi1>, vector<16x64xf32>
    %190 = arith.index_cast %162 : i32 to index
    %c0_82 = arith.constant 0 : index
    %c0_83 = arith.constant 0 : index
    %191 = vector.load %arg4[%190, %c0_82, %c0_83] : memref<8x16x16xi16, #tpu.memory_space<vmem>>, vector<1x16x16xi16>
    %192 = vector.shape_cast %191 : vector<1x16x16xi16> to vector<16x16xi16>
    %193 = arith.sitofp %192 : vector<16x16xi16> to vector<16x16xf32>
    %cst_84 = arith.constant dense<0.000000e+00> : vector<16x8xf32>
    %194 = tpu.matmul %193, %180, %cst_84 {dimension_numbers = #tpu.dot_dimension_numbers<[1], [1], [0], [0], [0, 0, 1, 0], [], []>} : vector<16x16xf32>, vector<8x16xf32>, vector<16x8xf32> -> vector<16x8xf32>
    %cst_85 = arith.constant dense<0.000000e+00> : vector<16x64xf32>
    %195 = tpu.matmul %194, %1, %cst_85 {dimension_numbers = #tpu.dot_dimension_numbers<[1], [0], [0], [1], [0, 0, 1, 1], [], []>} : vector<16x8xf32>, vector<8x64xf32>, vector<16x64xf32> -> vector<16x64xf32>
    %196 = arith.mulf %189, %195 : vector<16x64xf32>
    %cst_86 = arith.constant dense<0.000000e+00> : vector<8x64xf32>
    %197 = tpu.matmul %25, %196, %cst_86 {dimension_numbers = #tpu.dot_dimension_numbers<[1], [0], [0], [1], [0, 0, 1, 1], [], []>} : vector<8x16xf32>, vector<16x64xf32>, vector<8x64xf32> -> vector<8x64xf32>
    %198 = arith.addf %160, %197 : vector<8x64xf32>
    %c8_i32_87 = arith.constant 8 : i32
    %199 = arith.muli %c0_i32_18, %c8_i32_87 : i32
    %c4_i32_88 = arith.constant 4 : i32
    %200 = arith.addi %199, %c4_i32_88 : i32
    %c8_i32_89 = arith.constant 8 : i32
    %201 = arith.muli %arg0, %c8_i32_89 : i32
    %202 = arith.addi %201, %200 : i32
    %c2_i32_90 = arith.constant 2 : i32
    %203 = arith.muli %c2_i32_90, %202 : i32
    %204 = arith.index_cast %203 : i32 to index
    %205 = memref.load %arg1[%204] : memref<16xi32, #tpu.memory_space<smem>>
    %c2_i32_91 = arith.constant 2 : i32
    %206 = arith.muli %c2_i32_91, %202 : i32
    %c1_i32_92 = arith.constant 1 : i32
    %207 = arith.addi %206, %c1_i32_92 : i32
    %208 = arith.index_cast %207 : i32 to index
    %209 = memref.load %arg1[%208] : memref<16xi32, #tpu.memory_space<smem>>
    %210 = vector.broadcast %205 : i32 to vector<8x16xi32>
    %211 = arith.cmpi eq, %4, %210 : vector<8x16xi32>
    %c1_i32_93 = arith.constant 1 : i32
    %212 = arith.addi %205, %c1_i32_93 : i32
    %213 = vector.broadcast %212 : i32 to vector<8x16xi32>
    %214 = arith.cmpi eq, %4, %213 : vector<8x16xi32>
    %215 = arith.ori %211, %214 : vector<8x16xi1>
    %cst_94 = arith.constant 5.000000e-01 : f32
    %cst_95 = arith.constant 0.000000e+00 : f32
    %216 = vector.broadcast %cst_94 : f32 to vector<8x16xf32>
    %217 = vector.broadcast %cst_95 : f32 to vector<8x16xf32>
    %218 = arith.select %215, %216, %217 : vector<8x16xi1>, vector<8x16xf32>
    %219 = vector.broadcast %209 : i32 to vector<16x64xi32>
    %220 = arith.cmpi eq, %0, %219 : vector<16x64xi32>
    %c1_i32_96 = arith.constant 1 : i32
    %221 = arith.addi %209, %c1_i32_96 : i32
    %222 = vector.broadcast %221 : i32 to vector<16x64xi32>
    %223 = arith.cmpi eq, %0, %222 : vector<16x64xi32>
    %224 = arith.ori %220, %223 : vector<16x64xi1>
    %cst_97 = arith.constant 5.000000e-01 : f32
    %cst_98 = arith.constant 0.000000e+00 : f32
    %225 = vector.broadcast %cst_97 : f32 to vector<16x64xf32>
    %226 = vector.broadcast %cst_98 : f32 to vector<16x64xf32>
    %227 = arith.select %224, %225, %226 : vector<16x64xi1>, vector<16x64xf32>
    %228 = arith.index_cast %200 : i32 to index
    %c0_99 = arith.constant 0 : index
    %c0_100 = arith.constant 0 : index
    %229 = vector.load %arg4[%228, %c0_99, %c0_100] : memref<8x16x16xi16, #tpu.memory_space<vmem>>, vector<1x16x16xi16>
    %230 = vector.shape_cast %229 : vector<1x16x16xi16> to vector<16x16xi16>
    %231 = arith.sitofp %230 : vector<16x16xi16> to vector<16x16xf32>
    %cst_101 = arith.constant dense<0.000000e+00> : vector<16x8xf32>
    %232 = tpu.matmul %231, %218, %cst_101 {dimension_numbers = #tpu.dot_dimension_numbers<[1], [1], [0], [0], [0, 0, 1, 0], [], []>} : vector<16x16xf32>, vector<8x16xf32>, vector<16x8xf32> -> vector<16x8xf32>
    %cst_102 = arith.constant dense<0.000000e+00> : vector<16x64xf32>
    %233 = tpu.matmul %232, %1, %cst_102 {dimension_numbers = #tpu.dot_dimension_numbers<[1], [0], [0], [1], [0, 0, 1, 1], [], []>} : vector<16x8xf32>, vector<8x64xf32>, vector<16x64xf32> -> vector<16x64xf32>
    %234 = arith.mulf %227, %233 : vector<16x64xf32>
    %cst_103 = arith.constant dense<0.000000e+00> : vector<8x64xf32>
    %235 = tpu.matmul %30, %234, %cst_103 {dimension_numbers = #tpu.dot_dimension_numbers<[1], [0], [0], [1], [0, 0, 1, 1], [], []>} : vector<8x16xf32>, vector<16x64xf32>, vector<8x64xf32> -> vector<8x64xf32>
    %236 = arith.addf %198, %235 : vector<8x64xf32>
    %c8_i32_104 = arith.constant 8 : i32
    %237 = arith.muli %c0_i32_18, %c8_i32_104 : i32
    %c5_i32_105 = arith.constant 5 : i32
    %238 = arith.addi %237, %c5_i32_105 : i32
    %c8_i32_106 = arith.constant 8 : i32
    %239 = arith.muli %arg0, %c8_i32_106 : i32
    %240 = arith.addi %239, %238 : i32
    %c2_i32_107 = arith.constant 2 : i32
    %241 = arith.muli %c2_i32_107, %240 : i32
    %242 = arith.index_cast %241 : i32 to index
    %243 = memref.load %arg1[%242] : memref<16xi32, #tpu.memory_space<smem>>
    %c2_i32_108 = arith.constant 2 : i32
    %244 = arith.muli %c2_i32_108, %240 : i32
    %c1_i32_109 = arith.constant 1 : i32
    %245 = arith.addi %244, %c1_i32_109 : i32
    %246 = arith.index_cast %245 : i32 to index
    %247 = memref.load %arg1[%246] : memref<16xi32, #tpu.memory_space<smem>>
    %248 = vector.broadcast %243 : i32 to vector<8x16xi32>
    %249 = arith.cmpi eq, %4, %248 : vector<8x16xi32>
    %c1_i32_110 = arith.constant 1 : i32
    %250 = arith.addi %243, %c1_i32_110 : i32
    %251 = vector.broadcast %250 : i32 to vector<8x16xi32>
    %252 = arith.cmpi eq, %4, %251 : vector<8x16xi32>
    %253 = arith.ori %249, %252 : vector<8x16xi1>
    %cst_111 = arith.constant 5.000000e-01 : f32
    %cst_112 = arith.constant 0.000000e+00 : f32
    %254 = vector.broadcast %cst_111 : f32 to vector<8x16xf32>
    %255 = vector.broadcast %cst_112 : f32 to vector<8x16xf32>
    %256 = arith.select %253, %254, %255 : vector<8x16xi1>, vector<8x16xf32>
    %257 = vector.broadcast %247 : i32 to vector<16x64xi32>
    %258 = arith.cmpi eq, %0, %257 : vector<16x64xi32>
    %c1_i32_113 = arith.constant 1 : i32
    %259 = arith.addi %247, %c1_i32_113 : i32
    %260 = vector.broadcast %259 : i32 to vector<16x64xi32>
    %261 = arith.cmpi eq, %0, %260 : vector<16x64xi32>
    %262 = arith.ori %258, %261 : vector<16x64xi1>
    %cst_114 = arith.constant 5.000000e-01 : f32
    %cst_115 = arith.constant 0.000000e+00 : f32
    %263 = vector.broadcast %cst_114 : f32 to vector<16x64xf32>
    %264 = vector.broadcast %cst_115 : f32 to vector<16x64xf32>
    %265 = arith.select %262, %263, %264 : vector<16x64xi1>, vector<16x64xf32>
    %266 = arith.index_cast %238 : i32 to index
    %c0_116 = arith.constant 0 : index
    %c0_117 = arith.constant 0 : index
    %267 = vector.load %arg4[%266, %c0_116, %c0_117] : memref<8x16x16xi16, #tpu.memory_space<vmem>>, vector<1x16x16xi16>
    %268 = vector.shape_cast %267 : vector<1x16x16xi16> to vector<16x16xi16>
    %269 = arith.sitofp %268 : vector<16x16xi16> to vector<16x16xf32>
    %cst_118 = arith.constant dense<0.000000e+00> : vector<16x8xf32>
    %270 = tpu.matmul %269, %256, %cst_118 {dimension_numbers = #tpu.dot_dimension_numbers<[1], [1], [0], [0], [0, 0, 1, 0], [], []>} : vector<16x16xf32>, vector<8x16xf32>, vector<16x8xf32> -> vector<16x8xf32>
    %cst_119 = arith.constant dense<0.000000e+00> : vector<16x64xf32>
    %271 = tpu.matmul %270, %1, %cst_119 {dimension_numbers = #tpu.dot_dimension_numbers<[1], [0], [0], [1], [0, 0, 1, 1], [], []>} : vector<16x8xf32>, vector<8x64xf32>, vector<16x64xf32> -> vector<16x64xf32>
    %272 = arith.mulf %265, %271 : vector<16x64xf32>
    %cst_120 = arith.constant dense<0.000000e+00> : vector<8x64xf32>
    %273 = tpu.matmul %35, %272, %cst_120 {dimension_numbers = #tpu.dot_dimension_numbers<[1], [0], [0], [1], [0, 0, 1, 1], [], []>} : vector<8x16xf32>, vector<16x64xf32>, vector<8x64xf32> -> vector<8x64xf32>
    %274 = arith.addf %236, %273 : vector<8x64xf32>
    %c8_i32_121 = arith.constant 8 : i32
    %275 = arith.muli %c0_i32_18, %c8_i32_121 : i32
    %c6_i32_122 = arith.constant 6 : i32
    %276 = arith.addi %275, %c6_i32_122 : i32
    %c8_i32_123 = arith.constant 8 : i32
    %277 = arith.muli %arg0, %c8_i32_123 : i32
    %278 = arith.addi %277, %276 : i32
    %c2_i32_124 = arith.constant 2 : i32
    %279 = arith.muli %c2_i32_124, %278 : i32
    %280 = arith.index_cast %279 : i32 to index
    %281 = memref.load %arg1[%280] : memref<16xi32, #tpu.memory_space<smem>>
    %c2_i32_125 = arith.constant 2 : i32
    %282 = arith.muli %c2_i32_125, %278 : i32
    %c1_i32_126 = arith.constant 1 : i32
    %283 = arith.addi %282, %c1_i32_126 : i32
    %284 = arith.index_cast %283 : i32 to index
    %285 = memref.load %arg1[%284] : memref<16xi32, #tpu.memory_space<smem>>
    %286 = vector.broadcast %281 : i32 to vector<8x16xi32>
    %287 = arith.cmpi eq, %4, %286 : vector<8x16xi32>
    %c1_i32_127 = arith.constant 1 : i32
    %288 = arith.addi %281, %c1_i32_127 : i32
    %289 = vector.broadcast %288 : i32 to vector<8x16xi32>
    %290 = arith.cmpi eq, %4, %289 : vector<8x16xi32>
    %291 = arith.ori %287, %290 : vector<8x16xi1>
    %cst_128 = arith.constant 5.000000e-01 : f32
    %cst_129 = arith.constant 0.000000e+00 : f32
    %292 = vector.broadcast %cst_128 : f32 to vector<8x16xf32>
    %293 = vector.broadcast %cst_129 : f32 to vector<8x16xf32>
    %294 = arith.select %291, %292, %293 : vector<8x16xi1>, vector<8x16xf32>
    %295 = vector.broadcast %285 : i32 to vector<16x64xi32>
    %296 = arith.cmpi eq, %0, %295 : vector<16x64xi32>
    %c1_i32_130 = arith.constant 1 : i32
    %297 = arith.addi %285, %c1_i32_130 : i32
    %298 = vector.broadcast %297 : i32 to vector<16x64xi32>
    %299 = arith.cmpi eq, %0, %298 : vector<16x64xi32>
    %300 = arith.ori %296, %299 : vector<16x64xi1>
    %cst_131 = arith.constant 5.000000e-01 : f32
    %cst_132 = arith.constant 0.000000e+00 : f32
    %301 = vector.broadcast %cst_131 : f32 to vector<16x64xf32>
    %302 = vector.broadcast %cst_132 : f32 to vector<16x64xf32>
    %303 = arith.select %300, %301, %302 : vector<16x64xi1>, vector<16x64xf32>
    %304 = arith.index_cast %276 : i32 to index
    %c0_133 = arith.constant 0 : index
    %c0_134 = arith.constant 0 : index
    %305 = vector.load %arg4[%304, %c0_133, %c0_134] : memref<8x16x16xi16, #tpu.memory_space<vmem>>, vector<1x16x16xi16>
    %306 = vector.shape_cast %305 : vector<1x16x16xi16> to vector<16x16xi16>
    %307 = arith.sitofp %306 : vector<16x16xi16> to vector<16x16xf32>
    %cst_135 = arith.constant dense<0.000000e+00> : vector<16x8xf32>
    %308 = tpu.matmul %307, %294, %cst_135 {dimension_numbers = #tpu.dot_dimension_numbers<[1], [1], [0], [0], [0, 0, 1, 0], [], []>} : vector<16x16xf32>, vector<8x16xf32>, vector<16x8xf32> -> vector<16x8xf32>
    %cst_136 = arith.constant dense<0.000000e+00> : vector<16x64xf32>
    %309 = tpu.matmul %308, %1, %cst_136 {dimension_numbers = #tpu.dot_dimension_numbers<[1], [0], [0], [1], [0, 0, 1, 1], [], []>} : vector<16x8xf32>, vector<8x64xf32>, vector<16x64xf32> -> vector<16x64xf32>
    %310 = arith.mulf %303, %309 : vector<16x64xf32>
    %cst_137 = arith.constant dense<0.000000e+00> : vector<8x64xf32>
    %311 = tpu.matmul %40, %310, %cst_137 {dimension_numbers = #tpu.dot_dimension_numbers<[1], [0], [0], [1], [0, 0, 1, 1], [], []>} : vector<8x16xf32>, vector<16x64xf32>, vector<8x64xf32> -> vector<8x64xf32>
    %312 = arith.addf %274, %311 : vector<8x64xf32>
    %c8_i32_138 = arith.constant 8 : i32
    %313 = arith.muli %c0_i32_18, %c8_i32_138 : i32
    %c7_i32_139 = arith.constant 7 : i32
    %314 = arith.addi %313, %c7_i32_139 : i32
    %c8_i32_140 = arith.constant 8 : i32
    %315 = arith.muli %arg0, %c8_i32_140 : i32
    %316 = arith.addi %315, %314 : i32
    %c2_i32_141 = arith.constant 2 : i32
    %317 = arith.muli %c2_i32_141, %316 : i32
    %318 = arith.index_cast %317 : i32 to index
    %319 = memref.load %arg1[%318] : memref<16xi32, #tpu.memory_space<smem>>
    %c2_i32_142 = arith.constant 2 : i32
    %320 = arith.muli %c2_i32_142, %316 : i32
    %c1_i32_143 = arith.constant 1 : i32
    %321 = arith.addi %320, %c1_i32_143 : i32
    %322 = arith.index_cast %321 : i32 to index
    %323 = memref.load %arg1[%322] : memref<16xi32, #tpu.memory_space<smem>>
    %324 = vector.broadcast %319 : i32 to vector<8x16xi32>
    %325 = arith.cmpi eq, %4, %324 : vector<8x16xi32>
    %c1_i32_144 = arith.constant 1 : i32
    %326 = arith.addi %319, %c1_i32_144 : i32
    %327 = vector.broadcast %326 : i32 to vector<8x16xi32>
    %328 = arith.cmpi eq, %4, %327 : vector<8x16xi32>
    %329 = arith.ori %325, %328 : vector<8x16xi1>
    %cst_145 = arith.constant 5.000000e-01 : f32
    %cst_146 = arith.constant 0.000000e+00 : f32
    %330 = vector.broadcast %cst_145 : f32 to vector<8x16xf32>
    %331 = vector.broadcast %cst_146 : f32 to vector<8x16xf32>
    %332 = arith.select %329, %330, %331 : vector<8x16xi1>, vector<8x16xf32>
    %333 = vector.broadcast %323 : i32 to vector<16x64xi32>
    %334 = arith.cmpi eq, %0, %333 : vector<16x64xi32>
    %c1_i32_147 = arith.constant 1 : i32
    %335 = arith.addi %323, %c1_i32_147 : i32
    %336 = vector.broadcast %335 : i32 to vector<16x64xi32>
    %337 = arith.cmpi eq, %0, %336 : vector<16x64xi32>
    %338 = arith.ori %334, %337 : vector<16x64xi1>
    %cst_148 = arith.constant 5.000000e-01 : f32
    %cst_149 = arith.constant 0.000000e+00 : f32
    %339 = vector.broadcast %cst_148 : f32 to vector<16x64xf32>
    %340 = vector.broadcast %cst_149 : f32 to vector<16x64xf32>
    %341 = arith.select %338, %339, %340 : vector<16x64xi1>, vector<16x64xf32>
    %342 = arith.index_cast %314 : i32 to index
    %c0_150 = arith.constant 0 : index
    %c0_151 = arith.constant 0 : index
    %343 = vector.load %arg4[%342, %c0_150, %c0_151] : memref<8x16x16xi16, #tpu.memory_space<vmem>>, vector<1x16x16xi16>
    %344 = vector.shape_cast %343 : vector<1x16x16xi16> to vector<16x16xi16>
    %345 = arith.sitofp %344 : vector<16x16xi16> to vector<16x16xf32>
    %cst_152 = arith.constant dense<0.000000e+00> : vector<16x8xf32>
    %346 = tpu.matmul %345, %332, %cst_152 {dimension_numbers = #tpu.dot_dimension_numbers<[1], [1], [0], [0], [0, 0, 1, 0], [], []>} : vector<16x16xf32>, vector<8x16xf32>, vector<16x8xf32> -> vector<16x8xf32>
    %cst_153 = arith.constant dense<0.000000e+00> : vector<16x64xf32>
    %347 = tpu.matmul %346, %1, %cst_153 {dimension_numbers = #tpu.dot_dimension_numbers<[1], [0], [0], [1], [0, 0, 1, 1], [], []>} : vector<16x8xf32>, vector<8x64xf32>, vector<16x64xf32> -> vector<16x64xf32>
    %348 = arith.mulf %341, %347 : vector<16x64xf32>
    %cst_154 = arith.constant dense<0.000000e+00> : vector<8x64xf32>
    %349 = tpu.matmul %45, %348, %cst_154 {dimension_numbers = #tpu.dot_dimension_numbers<[1], [0], [0], [1], [0, 0, 1, 1], [], []>} : vector<8x16xf32>, vector<16x64xf32>, vector<8x64xf32> -> vector<8x64xf32>
    %350 = arith.addf %312, %349 : vector<8x64xf32>
    %351 = math.roundeven %350 : vector<8x64xf32>
    %352 = arith.index_cast %c0_i32_18 : i32 to index
    %c0_155 = arith.constant 0 : index
    %c0_156 = arith.constant 0 : index
    %353 = vector.load %arg5[%352, %c0_155, %c0_156] : memref<1x8x64xf32, #tpu.memory_space<vmem>>, vector<1x8x64xf32>
    %354 = vector.shape_cast %353 : vector<1x8x64xf32> to vector<8x64xf32>
    %355 = vector.shape_cast %351 : vector<8x64xf32> to vector<1x8x64xf32>
    tpu.vector_store %arg5[%352, %c0_155, %c0_156], %355 {strides = array<i32>} : memref<1x8x64xf32, #tpu.memory_space<vmem>>, vector<1x8x64xf32>,
    %c1_i32_157 = arith.constant 1 : i32
    return
  }
  func.func @transform_0(%arg0: i32, %arg1: memref<16xi32, #tpu.memory_space<smem>>) -> (i32, i32) {
    %c0_i32 = arith.constant 0 : i32
    %c0_i32_0 = arith.constant 0 : i32
    %c0_i32_1 = arith.constant 0 : i32
    return %c0_i32, %c0_i32_0 : i32, i32
  }
  func.func @transform_1(%arg0: i32, %arg1: memref<16xi32, #tpu.memory_space<smem>>) -> (i32, i32) {
    %c0_i32 = arith.constant 0 : i32
    %c0_i32_0 = arith.constant 0 : i32
    %c0_i32_1 = arith.constant 0 : i32
    return %c0_i32, %c0_i32_0 : i32, i32
  }
  func.func @transform_2(%arg0: i32, %arg1: memref<16xi32, #tpu.memory_space<smem>>) -> (i32, i32, i32) {
    %c0_i32 = arith.constant 0 : i32
    %c0_i32_0 = arith.constant 0 : i32
    %c0_i32_1 = arith.constant 0 : i32
    return %arg0, %c0_i32, %c0_i32_0 : i32, i32, i32
  }
  func.func @transform_3(%arg0: i32, %arg1: memref<16xi32, #tpu.memory_space<smem>>) -> (i32, i32, i32) {
    %c0_i32 = arith.constant 0 : i32
    %c0_i32_0 = arith.constant 0 : i32
    %c0_i32_1 = arith.constant 0 : i32
    return %arg0, %c0_i32, %c0_i32_0 : i32, i32, i32
  }
}

</mosaic_0001>

<llo_original>
// kernel: tpu_custom_call.1
$region0: #{tpu_custom_call.1}
  #allocation0 [shape = 'u32[]', space=smem, size = 0x4, offset = 0x4, fixed_abs, tag = 'smem constant byte address 0x4 - core index']
  #allocation1 [shape = 'u32[144,128]{1,0:T(1,128)}', space=vmem, size = 0x12000, scoped, tag = 'internal scratch']
  #allocation2 [shape = 's32[1]{0}', space=sflag, size = 0x4, scoped, tag = 'scoped memory for tpu_custom_call.1']
  #allocation3 [shape = 'u8[512]{0}', space=smem, size = 0x200, scoped, tag = 'prefetched SMEM operand 0']
  %s0 = inlined_call_operand.hbm [shape: s32[16], index: 0, kind: input, shape index: {}]
  %s1 = inlined_call_operand.hbm [shape: s32[16,64], index: 1, kind: input, shape index: {}]
  %s2 = inlined_call_operand.hbm [shape: f32[8,64], index: 2, kind: input, shape index: {}]
  %s3 = inlined_call_operand.hbm [shape: s16[8,16,16], index: 3, kind: input, shape index: {}]
  %s4 = inlined_call_operand.hbm [shape: f32[1,8,64], index: 4, kind: output, shape index: {}]
  %s5 = sld [smem:[#allocation0]]
  $region34: #{tpu_custom_call.1} parent=0
    _
  %s7 = ssub.s32 1, %s5
  %s8 = scalar_select 0, %s7, %s5
  %10 = dma.hbm_to_smem %s0, 16, [#allocation3], [#allocation2]
  %11 = dma.done [#allocation2], 16
  %12 = sfence
  $region1: #{tpu_custom_call.1} parent=0
    #allocation4 [shape = 'u8[8192]{0}', space=vmem, size = 0x2000, scoped, tag = 'input window, operand 1, single buffered']
    #allocation5 [shape = 's32[1]{0}', space=sflag, size = 0x4, scoped, tag = 'scoped memory for tpu_custom_call.1']
    #allocation6 [shape = 's32[1]{0}', space=sflag, size = 0x4, scoped, tag = 'scoped memory for tpu_custom_call.1']
    #allocation7 [shape = 'u8[4096]{0}', space=vmem, size = 0x1000, scoped, tag = 'input window, operand 2, single buffered']
    #allocation8 [shape = 's32[1]{0}', space=sflag, size = 0x4, scoped, tag = 'scoped memory for tpu_custom_call.1']
    #allocation9 [shape = 'u8[32768]{0}', space=vmem, size = 0x8000, scoped, tag = 'input window, operand 3, single buffered']
    #allocation10 [shape = 'u8[4096]{0}', space=vmem, size = 0x1000, scoped, tag = 'output window, operand 0, single buffered']
    %13 = vsyncpa [#allocation5], 0
    %14 = vsyncpa [#allocation8], 0
    %15 = vsyncpa [#allocation6], 0
    // Predicated region
    $region2: #{tpu_custom_call.1} parent=1 // pred_check
      _
    $region3: #{tpu_custom_call.1} parent=1 // pred_check_branch
      %17 = sbr.rel (0) target = $region5
    $region4: #{tpu_custom_call.1} parent=1 // pred_region
      %s19 = ssub.s32 256, 256
      %20 = vsyncadd [#allocation5], %s19
      %s21 = sshll.u32 [#allocation4], 4
      %s22 = int_to_ptr.vmem [resolvable:$true] %s21
      %27 = dma.hbm_to_vmem [thread:$0]  %s1, 256, %s22, [#allocation5], 128, 128, 8
    $region5: #{tpu_custom_call.1} parent=1 // pred_fallthru
      _
    // Predicated region
    $region6: #{tpu_custom_call.1} parent=1 // pred_check
      _
    $region7: #{tpu_custom_call.1} parent=1 // pred_check_branch
      %29 = sbr.rel (0) target = $region9
    $region8: #{tpu_custom_call.1} parent=1 // pred_region
      %s31 = ssub.s32 128, 128
      %32 = vsyncadd [#allocation8], %s31
      %s34 = sshll.u32 [#allocation7], 4
      %s35 = int_to_ptr.vmem [resolvable:$true] %s34
      %37 = dma.hbm_to_vmem [thread:$0]  %s2, 128, %s35, [#allocation8]
    $region9: #{tpu_custom_call.1} parent=1 // pred_fallthru
      _
    // Predicated region
    $region10: #{tpu_custom_call.1} parent=1 // pred_check
      _
    $region11: #{tpu_custom_call.1} parent=1 // pred_check_branch
      %39 = sbr.rel (0) target = $region13
    $region12: #{tpu_custom_call.1} parent=1 // pred_region
      %s41 = ssub.s32 1024, 1024
      %42 = vsyncadd [#allocation8], %s41
      %s43 = sshll.u32 [#allocation9], 4
      %s44 = int_to_ptr.vmem [resolvable:$true] %s43
      %49 = dma.hbm_to_vmem [thread:$0]  %s3, 1024, %s44, [#allocation8], 64, 64, 4
    $region13: #{tpu_custom_call.1} parent=1 // pred_fallthru
      _
    // Predicated region
    $region14: #{tpu_custom_call.1} parent=1 // pred_check
      _
    $region15: #{tpu_custom_call.1} parent=1 // pred_check_branch
      %51 = sbr.rel (0) target = $region17
    $region16: #{tpu_custom_call.1} parent=1 // pred_region
      %52 = dma.done [#allocation5], 256
    $region17: #{tpu_custom_call.1} parent=1 // pred_fallthru
      _
    // Predicated region
    $region18: #{tpu_custom_call.1} parent=1 // pred_check
      _
    $region19: #{tpu_custom_call.1} parent=1 // pred_check_branch
      %54 = sbr.rel (0) target = $region21
    $region20: #{tpu_custom_call.1} parent=1 // pred_region
      %55 = dma.done [#allocation8], 128
    $region21: #{tpu_custom_call.1} parent=1 // pred_fallthru
      _
    // Predicated region
    $region22: #{tpu_custom_call.1} parent=1 // pred_check
      _
    $region23: #{tpu_custom_call.1} parent=1 // pred_check_branch
      %57 = sbr.rel (0) target = $region25
    $region24: #{tpu_custom_call.1} parent=1 // pred_region
      %58 = dma.done [#allocation8], 1024
    $region25: #{tpu_custom_call.1} parent=1 // pred_fallthru
      _
    %v59 = vld [vmem:[#allocation4] sm:$0xff]
    %v60 = vld [vmem:[#allocation4 + $0x8] sm:$0xff]
    %v61 = vld [vmem:[#allocation7] sm:$0xff]
    %v62 = vlaneseq
    %v63 = vand.u32 %v62, 127
    %v64 = vlaneseq
    %v65 = vshrl.u32 %v64, 7
    %v66 = vsub.s32 %v63, %v65
    %vm67 = vcmp.eq.s32.totalorder %v65, 0
    %v68 = vsel %vm67, 1.0, 0.0
    %vm69 = vcmp.eq.s32.totalorder %v65, 1
    %v70 = vsel %vm69, 1.0, 0.0
    %vm71 = vcmp.eq.s32.totalorder %v65, 2
    %v72 = vsel %vm71, 1.0, 0.0
    %vm73 = vcmp.eq.s32.totalorder %v65, 3
    %v74 = vsel %vm73, 1.0, 0.0
    %vm75 = vcmp.eq.s32.totalorder %v65, 4
    %v76 = vsel %vm75, 1.0, 0.0
    %vm77 = vcmp.eq.s32.totalorder %v65, 5
    %v78 = vsel %vm77, 1.0, 0.0
    %vm79 = vcmp.eq.s32.totalorder %v65, 6
    %v80 = vsel %vm79, 1.0, 0.0
    %vm81 = vcmp.eq.s32.totalorder %v65, 7
    %v82 = vsel %vm81, 1.0, 0.0
    %s83 = smul.u32 0, 16
    %s84 = sld [smem:[#allocation3 + %s83]]
    %s85 = sadd.s32 %s83, 1
    %s86 = sld [smem:[#allocation3 + %s85]]
    %v87 = vstv %s84
    %vm88 = vcmp.eq.s32.totalorder %v66, %v87
    %s89 = sadd.s32 %s84, 1
    %v90 = vstv %s89
    %vm91 = vcmp.eq.s32.totalorder %v66, %v90
    %vm92 = vmor %vm88, %vm91
    %v93 = vsel %vm92, 0.5, 0.0
    %v94 = vstv %s86
    %vm95 = vcmp.eq.s32.totalorder %v59, %v94
    %vm96 = vcmp.eq.s32.totalorder %v60, %v94
    %s97 = sadd.s32 %s86, 1
    %v98 = vstv %s97
    %vm99 = vcmp.eq.s32.totalorder %v59, %v98
    %vm100 = vcmp.eq.s32.totalorder %v60, %v98
    %vm101 = vmor %vm95, %vm99
    %vm102 = vmor %vm96, %vm100
    %v103 = vsel %vm101, 0.5, 0.0
    %v104 = vsel %vm102, 0.5, 0.0
    %v105 = vld [vmem:[#allocation9] sm:$0xf]
    %v106 = vld [vmem:[#allocation9 + $0x4] sm:$0xf]
    %v107 = vunpack.c.l.b16 %v105
    %v108 = vunpack.c.l.b16 %v106
    %v109 = vcvt.s32.f32 %v107
    %v110 = vcvt.s32.f32 %v108
    %vm111 = vcmask 130048
    %v113 = vsel %vm111, %v109, 0
    %v116 = vsel %vm111, %v110, 0
    %v119 = vsel %vm111, %v93, 0
    %121 = vmatprep.subr.mxu0 0.0
    %122 = vmatpush1.xpose.msra.mxu0 0.0
    %123 = vmatprep.subr.mxu0 0.0
    %124 = vmatpush1.xpose.msra.mxu0 0.0
    %125 = vmatprep.subr.mxu0 0.0
    %126 = vmatpush1.xpose.msra.mxu0 0.0
    %127 = vmatprep.subr.mxu0 0.0
    %128 = vmatpush1.xpose.msra.mxu0 0.0
    %129 = vmatprep.subr.mxu0 0.0
    %130 = vmatpush1.xpose.msra.mxu0 0.0
    %131 = vmatprep.subr.mxu0 0.0
    %132 = vmatpush1.xpose.msra.mxu0 0.0
    %133 = vmatprep.subr.mxu0 0.0
    %134 = vmatpush1.xpose.msra.mxu0 0.0
    %135 = vmatprep.subr.mxu0 0.0
    %136 = vmatpush1.xpose.msra.mxu0 0.0
    %137 = vmatprep.subr.mxu0 0.0
    %138 = vmatpush1.xpose.msra.mxu0 0.0
    %139 = vmatprep.subr.mxu0 0.0
    %140 = vmatpush1.xpose.msra.mxu0 0.0
    %141 = vmatprep.subr.mxu0 0.0
    %142 = vmatpush1.xpose.msra.mxu0 0.0
    %143 = vmatprep.subr.mxu0 0.0
    %144 = vmatpush1.xpose.msra.mxu0 0.0
    %145 = vmatprep.subr.mxu0 0.0
    %146 = vmatpush1.xpose.msra.mxu0 0.0
    %147 = vmatprep.subr.mxu0 0.0
    %148 = vmatpush1.xpose.msra.mxu0 0.0
    %149 = vmatprep.subr.mxu0 0.0
    %150 = vmatpush1.xpose.msra.mxu0 0.0
    %151 = vmatprep.subr.mxu0 0.0
    %152 = vmatpush1.xpose.msra.mxu0 %v119
    %153 = vmatprep.subr.mxu0 0.0
    %154 = vmatpush2.xpose.msra.mxu0 0.0
    %155 = vmatprep.subr.mxu0 0.0
    %156 = vmatpush2.xpose.msra.mxu0 0.0
    %157 = vmatprep.subr.mxu0 0.0
    %158 = vmatpush2.xpose.msra.mxu0 0.0
    %159 = vmatprep.subr.mxu0 0.0
    %160 = vmatpush2.xpose.msra.mxu0 0.0
    %161 = vmatprep.subr.mxu0 0.0
    %162 = vmatpush2.xpose.msra.mxu0 0.0
    %163 = vmatprep.subr.mxu0 0.0
    %164 = vmatpush2.xpose.msra.mxu0 0.0
    %165 = vmatprep.subr.mxu0 0.0
    %166 = vmatpush2.xpose.msra.mxu0 0.0
    %167 = vmatprep.subr.mxu0 0.0
    %168 = vmatpush2.xpose.msra.mxu0 0.0
    %169 = vmatprep.subr.mxu0 0.0
    %170 = vmatpush2.xpose.msra.mxu0 0.0
    %171 = vmatprep.subr.mxu0 0.0
    %172 = vmatpush2.xpose.msra.mxu0 0.0
    %173 = vmatprep.subr.mxu0 0.0
    %174 = vmatpush2.xpose.msra.mxu0 0.0
    %175 = vmatprep.subr.mxu0 0.0
    %176 = vmatpush2.xpose.msra.mxu0 0.0
    %177 = vmatprep.subr.mxu0 0.0
    %178 = vmatpush2.xpose.msra.mxu0 0.0
    %179 = vmatprep.subr.mxu0 0.0
    %180 = vmatpush2.xpose.msra.mxu0 0.0
    %181 = vmatprep.subr.mxu0 0.0
    %182 = vmatpush2.xpose.msra.mxu0 0.0
    %183 = vmatprep.subr.mxu0 0.0
    %184 = vmatpush2.xpose.msra.mxu0 0.0
    %185 = vmatprep.mubr.f32.mxu0 0.0
    %186 = vmatmul.mubr.f32.gmra.mxu0 %v113
    %v187 = vpop.f32.mrf.mxu0
    %v188 = vadd.f32 0.0, %v187
    %v189 = vpop.f32.mrf.mxu0
    %190 = vmatprep.mubr.f32.mxu0 0.0
    %191 = vmatmul.mubr.f32.gmra.mxu0 %v116
    %v192 = vpop.f32.mrf.mxu0
    %v193 = vadd.f32 0.0, %v192
    %v194 = vpop.f32.mrf.mxu0
    %195 = vdwg.mxu0
    %vm196 = vcmask 64512
    %v198 = vsel %vm196, %v188, 0
    %v201 = vsel %vm196, %v193, 0
    %203 = vmatprep.subr.mxu0 0.0
    %204 = vmatpush1.msra.mxu0 0.0
    %205 = vmatprep.subr.mxu0 0.0
    %206 = vmatpush1.msra.mxu0 0.0
    %207 = vmatprep.subr.mxu0 0.0
    %208 = vmatpush1.msra.mxu0 0.0
    %209 = vmatprep.subr.mxu0 0.0
    %210 = vmatpush1.msra.mxu0 0.0
    %211 = vmatprep.subr.mxu0 0.0
    %212 = vmatpush1.msra.mxu0 0.0
    %213 = vmatprep.subr.mxu0 0.0
    %214 = vmatpush1.msra.mxu0 0.0
    %215 = vmatprep.subr.mxu0 0.0
    %216 = vmatpush1.msra.mxu0 0.0
    %217 = vmatprep.subr.mxu0 0.0
    %218 = vmatpush1.msra.mxu0 0.0
    %219 = vmatprep.subr.mxu0 0.0
    %220 = vmatpush1.msra.mxu0 0.0
    %221 = vmatprep.subr.mxu0 0.0
    %222 = vmatpush1.msra.mxu0 0.0
    %223 = vmatprep.subr.mxu0 0.0
    %224 = vmatpush1.msra.mxu0 0.0
    %225 = vmatprep.subr.mxu0 0.0
    %226 = vmatpush1.msra.mxu0 0.0
    %227 = vmatprep.subr.mxu0 0.0
    %228 = vmatpush1.msra.mxu0 0.0
    %229 = vmatprep.subr.mxu0 0.0
    %230 = vmatpush1.msra.mxu0 0.0
    %231 = vmatprep.subr.mxu0 0.0
    %232 = vmatpush1.msra.mxu0 0.0
    %233 = vmatprep.subr.mxu0 0.0
    %234 = vmatpush1.msra.mxu0 %v61
    %235 = vmatprep.subr.mxu0 0.0
    %236 = vmatpush2.msra.mxu0 0.0
    %237 = vmatprep.subr.mxu0 0.0
    %238 = vmatpush2.msra.mxu0 0.0
    %239 = vmatprep.subr.mxu0 0.0
    %240 = vmatpush2.msra.mxu0 0.0
    %241 = vmatprep.subr.mxu0 0.0
    %242 = vmatpush2.msra.mxu0 0.0
    %243 = vmatprep.subr.mxu0 0.0
    %244 = vmatpush2.msra.mxu0 0.0
    %245 = vmatprep.subr.mxu0 0.0
    %246 = vmatpush2.msra.mxu0 0.0
    %247 = vmatprep.subr.mxu0 0.0
    %248 = vmatpush2.msra.mxu0 0.0
    %249 = vmatprep.subr.mxu0 0.0
    %250 = vmatpush2.msra.mxu0 0.0
    %251 = vmatprep.subr.mxu0 0.0
    %252 = vmatpush2.msra.mxu0 0.0
    %253 = vmatprep.subr.mxu0 0.0
    %254 = vmatpush2.msra.mxu0 0.0
    %255 = vmatprep.subr.mxu0 0.0
    %256 = vmatpush2.msra.mxu0 0.0
    %257 = vmatprep.subr.mxu0 0.0
    %258 = vmatpush2.msra.mxu0 0.0
    %259 = vmatprep.subr.mxu0 0.0
    %260 = vmatpush2.msra.mxu0 0.0
    %261 = vmatprep.subr.mxu0 0.0
    %262 = vmatpush2.msra.mxu0 0.0
    %263 = vmatprep.subr.mxu0 0.0
    %264 = vmatpush2.msra.mxu0 0.0
    %265 = vmatprep.subr.mxu0 0.0
    %266 = vmatpush2.msra.mxu0 0.0
    %267 = vmatprep.mubr.f32.mxu0 0.0
    %268 = vmatmul.mubr.f32.gmra.mxu0 %v198
    %v269 = vpop.f32.mrf.mxu0
    %v270 = vadd.f32 0.0, %v269
    %v271 = vpop.f32.mrf.mxu0
    %272 = vmatprep.mubr.f32.mxu0 0.0
    %273 = vmatmul.mubr.f32.gmra.mxu0 %v201
    %v274 = vpop.f32.mrf.mxu0
    %v275 = vadd.f32 0.0, %v274
    %v276 = vpop.f32.mrf.mxu0
    %277 = vdwg.mxu0
    %v278 = vmul.f32 %v103, %v270
    %v279 = vmul.f32 %v104, %v275
    %s280 = smul.u32 0, 8
    %s281 = sadd.s32 %s280, 1
    %s282 = smul.u32 %s281, 2
    %s283 = sld [smem:[#allocation3 + %s282]]
    %s284 = sadd.s32 %s282, 1
    %s285 = sld [smem:[#allocation3 + %s284]]
    %v286 = vstv %s283
    %vm287 = vcmp.eq.s32.totalorder %v66, %v286
    %s288 = sadd.s32 %s283, 1
    %v289 = vstv %s288
    %vm290 = vcmp.eq.s32.totalorder %v66, %v289
    %vm291 = vmor %vm287, %vm290
    %v292 = vsel %vm291, 0.5, 0.0
    %v293 = vstv %s285
    %vm294 = vcmp.eq.s32.totalorder %v59, %v293
    %vm295 = vcmp.eq.s32.totalorder %v60, %v293
    %s296 = sadd.s32 %s285, 1
    %v297 = vstv %s296
    %vm298 = vcmp.eq.s32.totalorder %v59, %v297
    %vm299 = vcmp.eq.s32.totalorder %v60, %v297
    %vm300 = vmor %vm294, %vm298
    %vm301 = vmor %vm295, %vm299
    %v302 = vsel %vm300, 0.5, 0.0
    %v303 = vsel %vm301, 0.5, 0.0
    %s304 = scalar_lea.vmem [#allocation9], 8
    %v305 = vld [vmem:[%s304] sm:$0xf]
    %v306 = vld [vmem:[%s304 + $0x4] sm:$0xf]
    %v307 = vunpack.c.l.b16 %v305
    %v308 = vunpack.c.l.b16 %v306
    %v309 = vcvt.s32.f32 %v307
    %v310 = vcvt.s32.f32 %v308
    %v312 = vsel %vm111, %v309, 0
    %v315 = vsel %vm111, %v310, 0
    %v318 = vsel %vm111, %v292, 0
    %320 = vmatprep.subr.mxu0 0.0
    %321 = vmatpush1.xpose.msra.mxu0 0.0
    %322 = vmatprep.subr.mxu0 0.0
    %323 = vmatpush1.xpose.msra.mxu0 0.0
    %324 = vmatprep.subr.mxu0 0.0
    %325 = vmatpush1.xpose.msra.mxu0 0.0
    %326 = vmatprep.subr.mxu0 0.0
    %327 = vmatpush1.xpose.msra.mxu0 0.0
    %328 = vmatprep.subr.mxu0 0.0
    %329 = vmatpush1.xpose.msra.mxu0 0.0
    %330 = vmatprep.subr.mxu0 0.0
    %331 = vmatpush1.xpose.msra.mxu0 0.0
    %332 = vmatprep.subr.mxu0 0.0
    %333 = vmatpush1.xpose.msra.mxu0 0.0
    %334 = vmatprep.subr.mxu0 0.0
    %335 = vmatpush1.xpose.msra.mxu0 0.0
    %336 = vmatprep.subr.mxu0 0.0
    %337 = vmatpush1.xpose.msra.mxu0 0.0
    %338 = vmatprep.subr.mxu0 0.0
    %339 = vmatpush1.xpose.msra.mxu0 0.0
    %340 = vmatprep.subr.mxu0 0.0
    %341 = vmatpush1.xpose.msra.mxu0 0.0
    %342 = vmatprep.subr.mxu0 0.0
    %343 = vmatpush1.xpose.msra.mxu0 0.0
    %344 = vmatprep.subr.mxu0 0.0
    %345 = vmatpush1.xpose.msra.mxu0 0.0
    %346 = vmatprep.subr.mxu0 0.0
    %347 = vmatpush1.xpose.msra.mxu0 0.0
    %348 = vmatprep.subr.mxu0 0.0
    %349 = vmatpush1.xpose.msra.mxu0 0.0
    %350 = vmatprep.subr.mxu0 0.0
    %351 = vmatpush1.xpose.msra.mxu0 %v318
    %352 = vmatprep.subr.mxu0 0.0
    %353 = vmatpush2.xpose.msra.mxu0 0.0
    %354 = vmatprep.subr.mxu0 0.0
    %355 = vmatpush2.xpose.msra.mxu0 0.0
    %356 = vmatprep.subr.mxu0 0.0
    %357 = vmatpush2.xpose.msra.mxu0 0.0
    %358 = vmatprep.subr.mxu0 0.0
    %359 = vmatpush2.xpose.msra.mxu0 0.0
    %360 = vmatprep.subr.mxu0 0.0
    %361 = vmatpush2.xpose.msra.mxu0 0.0
    %362 = vmatprep.subr.mxu0 0.0
    %363 = vmatpush2.xpose.msra.mxu0 0.0
    %364 = vmatprep.subr.mxu0 0.0
    %365 = vmatpush2.xpose.msra.mxu0 0.0
    %366 = vmatprep.subr.mxu0 0.0
    %367 = vmatpush2.xpose.msra.mxu0 0.0
    %368 = vmatprep.subr.mxu0 0.0
    %369 = vmatpush2.xpose.msra.mxu0 0.0
    %370 = vmatprep.subr.mxu0 0.0
    %371 = vmatpush2.xpose.msra.mxu0 0.0
    %372 = vmatprep.subr.mxu0 0.0
    %373 = vmatpush2.xpose.msra.mxu0 0.0
    %374 = vmatprep.subr.mxu0 0.0
    %375 = vmatpush2.xpose.msra.mxu0 0.0
    %376 = vmatprep.subr.mxu0 0.0
    %377 = vmatpush2.xpose.msra.mxu0 0.0
    %378 = vmatprep.subr.mxu0 0.0
    %379 = vmatpush2.xpose.msra.mxu0 0.0
    %380 = vmatprep.subr.mxu0 0.0
    %381 = vmatpush2.xpose.msra.mxu0 0.0
    %382 = vmatprep.subr.mxu0 0.0
    %383 = vmatpush2.xpose.msra.mxu0 0.0
    %384 = vmatprep.mubr.f32.mxu0 0.0
    %385 = vmatmul.mubr.f32.gmra.mxu0 %v312
    %v386 = vpop.f32.mrf.mxu0
    %v387 = vadd.f32 0.0, %v386
    %v388 = vpop.f32.mrf.mxu0
    %389 = vmatprep.mubr.f32.mxu0 0.0
    %390 = vmatmul.mubr.f32.gmra.mxu0 %v315
    %v391 = vpop.f32.mrf.mxu0
    %v392 = vadd.f32 0.0, %v391
    %v393 = vpop.f32.mrf.mxu0
    %394 = vdwg.mxu0
    %v396 = vsel %vm196, %v387, 0
    %v399 = vsel %vm196, %v392, 0
    %401 = vmatprep.subr.mxu0 0.0
    %402 = vmatpush1.msra.mxu0 0.0
    %403 = vmatprep.subr.mxu0 0.0
    %404 = vmatpush1.msra.mxu0 0.0
    %405 = vmatprep.subr.mxu0 0.0
    %406 = vmatpush1.msra.mxu0 0.0
    %407 = vmatprep.subr.mxu0 0.0
    %408 = vmatpush1.msra.mxu0 0.0
    %409 = vmatprep.subr.mxu0 0.0
    %410 = vmatpush1.msra.mxu0 0.0
    %411 = vmatprep.subr.mxu0 0.0
    %412 = vmatpush1.msra.mxu0 0.0
    %413 = vmatprep.subr.mxu0 0.0
    %414 = vmatpush1.msra.mxu0 0.0
    %415 = vmatprep.subr.mxu0 0.0
    %416 = vmatpush1.msra.mxu0 0.0
    %417 = vmatprep.subr.mxu0 0.0
    %418 = vmatpush1.msra.mxu0 0.0
    %419 = vmatprep.subr.mxu0 0.0
    %420 = vmatpush1.msra.mxu0 0.0
    %421 = vmatprep.subr.mxu0 0.0
    %422 = vmatpush1.msra.mxu0 0.0
    %423 = vmatprep.subr.mxu0 0.0
    %424 = vmatpush1.msra.mxu0 0.0
    %425 = vmatprep.subr.mxu0 0.0
    %426 = vmatpush1.msra.mxu0 0.0
    %427 = vmatprep.subr.mxu0 0.0
    %428 = vmatpush1.msra.mxu0 0.0
    %429 = vmatprep.subr.mxu0 0.0
    %430 = vmatpush1.msra.mxu0 0.0
    %431 = vmatprep.subr.mxu0 0.0
    %432 = vmatpush1.msra.mxu0 %v61
    %433 = vmatprep.subr.mxu0 0.0
    %434 = vmatpush2.msra.mxu0 0.0
    %435 = vmatprep.subr.mxu0 0.0
    %436 = vmatpush2.msra.mxu0 0.0
    %437 = vmatprep.subr.mxu0 0.0
    %438 = vmatpush2.msra.mxu0 0.0
    %439 = vmatprep.subr.mxu0 0.0
    %440 = vmatpush2.msra.mxu0 0.0
    %441 = vmatprep.subr.mxu0 0.0
    %442 = vmatpush2.msra.mxu0 0.0
    %443 = vmatprep.subr.mxu0 0.0
    %444 = vmatpush2.msra.mxu0 0.0
    %445 = vmatprep.subr.mxu0 0.0
    %446 = vmatpush2.msra.mxu0 0.0
    %447 = vmatprep.subr.mxu0 0.0
    %448 = vmatpush2.msra.mxu0 0.0
    %449 = vmatprep.subr.mxu0 0.0
    %450 = vmatpush2.msra.mxu0 0.0
    %451 = vmatprep.subr.mxu0 0.0
    %452 = vmatpush2.msra.mxu0 0.0
    %453 = vmatprep.subr.mxu0 0.0
    %454 = vmatpush2.msra.mxu0 0.0
    %455 = vmatprep.subr.mxu0 0.0
    %456 = vmatpush2.msra.mxu0 0.0
    %457 = vmatprep.subr.mxu0 0.0
    %458 = vmatpush2.msra.mxu0 0.0
    %459 = vmatprep.subr.mxu0 0.0
    %460 = vmatpush2.msra.mxu0 0.0
    %461 = vmatprep.subr.mxu0 0.0
    %462 = vmatpush2.msra.mxu0 0.0
    %463 = vmatprep.subr.mxu0 0.0
    %464 = vmatpush2.msra.mxu0 0.0
    %465 = vmatprep.mubr.f32.mxu0 0.0
    %466 = vmatmul.mubr.f32.gmra.mxu0 %v396
    %v467 = vpop.f32.mrf.mxu0
    %v468 = vadd.f32 0.0, %v467
    %v469 = vpop.f32.mrf.mxu0
    %470 = vmatprep.mubr.f32.mxu0 0.0
    %471 = vmatmul.mubr.f32.gmra.mxu0 %v399
    %v472 = vpop.f32.mrf.mxu0
    %v473 = vadd.f32 0.0, %v472
    %v474 = vpop.f32.mrf.mxu0
    %475 = vdwg.mxu0
    %v476 = vmul.f32 %v302, %v468
    %v477 = vmul.f32 %v303, %v473
    %v479 = vsel %vm111, %v70, 0
    %481 = vmatprep.subr.mxu0 0.0
    %482 = vmatpush1.msra.mxu0 0.0
    %483 = vmatprep.subr.mxu0 0.0
    %484 = vmatpush1.msra.mxu0 0.0
    %485 = vmatprep.subr.mxu0 0.0
    %486 = vmatpush1.msra.mxu0 0.0
    %487 = vmatprep.subr.mxu0 0.0
    %488 = vmatpush1.msra.mxu0 0.0
    %489 = vmatprep.subr.mxu0 0.0
    %490 = vmatpush1.msra.mxu0 0.0
    %491 = vmatprep.subr.mxu0 0.0
    %492 = vmatpush1.msra.mxu0 0.0
    %493 = vmatprep.subr.mxu0 0.0
    %494 = vmatpush1.msra.mxu0 0.0
    %495 = vmatprep.subr.mxu0 0.0
    %496 = vmatpush1.msra.mxu0 0.0
    %497 = vmatprep.subr.mxu0 0.0
    %498 = vmatpush1.msra.mxu0 0.0
    %499 = vmatprep.subr.mxu0 0.0
    %500 = vmatpush1.msra.mxu0 0.0
    %501 = vmatprep.subr.mxu0 0.0
    %502 = vmatpush1.msra.mxu0 0.0
    %503 = vmatprep.subr.mxu0 0.0
    %504 = vmatpush1.msra.mxu0 0.0
    %505 = vmatprep.subr.mxu0 0.0
    %506 = vmatpush1.msra.mxu0 0.0
    %507 = vmatprep.subr.mxu0 0.0
    %508 = vmatpush1.msra.mxu0 0.0
    %509 = vmatprep.subr.mxu0 0.0
    %510 = vmatpush1.msra.mxu0 %v477
    %511 = vmatprep.subr.mxu0 0.0
    %512 = vmatpush1.msra.mxu0 %v476
    %513 = vmatprep.subr.mxu0 0.0
    %514 = vmatpush2.msra.mxu0 0.0
    %515 = vmatprep.subr.mxu0 0.0
    %516 = vmatpush2.msra.mxu0 0.0
    %517 = vmatprep.subr.mxu0 0.0
    %518 = vmatpush2.msra.mxu0 0.0
    %519 = vmatprep.subr.mxu0 0.0
    %520 = vmatpush2.msra.mxu0 0.0
    %521 = vmatprep.subr.mxu0 0.0
    %522 = vmatpush2.msra.mxu0 0.0
    %523 = vmatprep.subr.mxu0 0.0
    %524 = vmatpush2.msra.mxu0 0.0
    %525 = vmatprep.subr.mxu0 0.0
    %526 = vmatpush2.msra.mxu0 0.0
    %527 = vmatprep.subr.mxu0 0.0
    %528 = vmatpush2.msra.mxu0 0.0
    %529 = vmatprep.subr.mxu0 0.0
    %530 = vmatpush2.msra.mxu0 0.0
    %531 = vmatprep.subr.mxu0 0.0
    %532 = vmatpush2.msra.mxu0 0.0
    %533 = vmatprep.subr.mxu0 0.0
    %534 = vmatpush2.msra.mxu0 0.0
    %535 = vmatprep.subr.mxu0 0.0
    %536 = vmatpush2.msra.mxu0 0.0
    %537 = vmatprep.subr.mxu0 0.0
    %538 = vmatpush2.msra.mxu0 0.0
    %539 = vmatprep.subr.mxu0 0.0
    %540 = vmatpush2.msra.mxu0 0.0
    %541 = vmatprep.subr.mxu0 0.0
    %542 = vmatpush2.msra.mxu0 0.0
    %543 = vmatprep.subr.mxu0 0.0
    %544 = vmatpush2.msra.mxu0 0.0
    %545 = vmatprep.mubr.f32.mxu0 0.0
    %546 = vmatmul.mubr.f32.gmra.mxu0 %v479
    %v547 = vpop.f32.mrf.mxu0
    %v548 = vadd.f32 0.0, %v547
    %v549 = vpop.f32.mrf.mxu0
    %550 = vdwg.mxu0
    %v552 = vsel %vm111, %v68, 0
    %554 = vmatprep.subr.mxu0 0.0
    %555 = vmatpush1.msra.mxu0 0.0
    %556 = vmatprep.subr.mxu0 0.0
    %557 = vmatpush1.msra.mxu0 0.0
    %558 = vmatprep.subr.mxu0 0.0
    %559 = vmatpush1.msra.mxu0 0.0
    %560 = vmatprep.subr.mxu0 0.0
    %561 = vmatpush1.msra.mxu0 0.0
    %562 = vmatprep.subr.mxu0 0.0
    %563 = vmatpush1.msra.mxu0 0.0
    %564 = vmatprep.subr.mxu0 0.0
    %565 = vmatpush1.msra.mxu0 0.0
    %566 = vmatprep.subr.mxu0 0.0
    %567 = vmatpush1.msra.mxu0 0.0
    %568 = vmatprep.subr.mxu0 0.0
    %569 = vmatpush1.msra.mxu0 0.0
    %570 = vmatprep.subr.mxu0 0.0
    %571 = vmatpush1.msra.mxu0 0.0
    %572 = vmatprep.subr.mxu0 0.0
    %573 = vmatpush1.msra.mxu0 0.0
    %574 = vmatprep.subr.mxu0 0.0
    %575 = vmatpush1.msra.mxu0 0.0
    %576 = vmatprep.subr.mxu0 0.0
    %577 = vmatpush1.msra.mxu0 0.0
    %578 = vmatprep.subr.mxu0 0.0
    %579 = vmatpush1.msra.mxu0 0.0
    %580 = vmatprep.subr.mxu0 0.0
    %581 = vmatpush1.msra.mxu0 0.0
    %582 = vmatprep.subr.mxu0 0.0
    %583 = vmatpush1.msra.mxu0 %v279
    %584 = vmatprep.subr.mxu0 0.0
    %585 = vmatpush1.msra.mxu0 %v278
    %586 = vmatprep.subr.mxu0 0.0
    %587 = vmatpush2.msra.mxu0 0.0
    %588 = vmatprep.subr.mxu0 0.0
    %589 = vmatpush2.msra.mxu0 0.0
    %590 = vmatprep.subr.mxu0 0.0
    %591 = vmatpush2.msra.mxu0 0.0
    %592 = vmatprep.subr.mxu0 0.0
    %593 = vmatpush2.msra.mxu0 0.0
    %594 = vmatprep.subr.mxu0 0.0
    %595 = vmatpush2.msra.mxu0 0.0
    %596 = vmatprep.subr.mxu0 0.0
    %597 = vmatpush2.msra.mxu0 0.0
    %598 = vmatprep.subr.mxu0 0.0
    %599 = vmatpush2.msra.mxu0 0.0
    %600 = vmatprep.subr.mxu0 0.0
    %601 = vmatpush2.msra.mxu0 0.0
    %602 = vmatprep.subr.mxu0 0.0
    %603 = vmatpush2.msra.mxu0 0.0
    %604 = vmatprep.subr.mxu0 0.0
    %605 = vmatpush2.msra.mxu0 0.0
    %606 = vmatprep.subr.mxu0 0.0
    %607 = vmatpush2.msra.mxu0 0.0
    %608 = vmatprep.subr.mxu0 0.0
    %609 = vmatpush2.msra.mxu0 0.0
    %610 = vmatprep.subr.mxu0 0.0
    %611 = vmatpush2.msra.mxu0 0.0
    %612 = vmatprep.subr.mxu0 0.0
    %613 = vmatpush2.msra.mxu0 0.0
    %614 = vmatprep.subr.mxu0 0.0
    %615 = vmatpush2.msra.mxu0 0.0
    %616 = vmatprep.subr.mxu0 0.0
    %617 = vmatpush2.msra.mxu0 0.0
    %618 = vmatprep.mubr.f32.mxu0 0.0
    %619 = vmatmul.mubr.f32.gmra.mxu0 %v552
    %v620 = vpop.f32.mrf.mxu0
    %v621 = vadd.f32 %v548, %v620
    %v622 = vpop.f32.mrf.mxu0
    %623 = vdwg.mxu0
    %s624 = sadd.s32 %s280, 2
    %s625 = smul.u32 %s624, 2
    %s626 = sld [smem:[#allocation3 + %s625]]
    %s627 = sadd.s32 %s625, 1
    %s628 = sld [smem:[#allocation3 + %s627]]
    %v629 = vstv %s626
    %vm630 = vcmp.eq.s32.totalorder %v66, %v629
    %s631 = sadd.s32 %s626, 1
    %v632 = vstv %s631
    %vm633 = vcmp.eq.s32.totalorder %v66, %v632
    %vm634 = vmor %vm630, %vm633
    %v635 = vsel %vm634, 0.5, 0.0
    %v636 = vstv %s628
    %vm637 = vcmp.eq.s32.totalorder %v59, %v636
    %vm638 = vcmp.eq.s32.totalorder %v60, %v636
    %s639 = sadd.s32 %s628, 1
    %v640 = vstv %s639
    %vm641 = vcmp.eq.s32.totalorder %v59, %v640
    %vm642 = vcmp.eq.s32.totalorder %v60, %v640
    %vm643 = vmor %vm637, %vm641
    %vm644 = vmor %vm638, %vm642
    %v645 = vsel %vm643, 0.5, 0.0
    %v646 = vsel %vm644, 0.5, 0.0
    %s647 = scalar_lea.vmem [#allocation9], 16
    %v648 = vld [vmem:[%s647] sm:$0xf]
    %v649 = vld [vmem:[%s647 + $0x4] sm:$0xf]
    %v650 = vunpack.c.l.b16 %v648
    %v651 = vunpack.c.l.b16 %v649
    %v652 = vcvt.s32.f32 %v650
    %v653 = vcvt.s32.f32 %v651
    %v655 = vsel %vm111, %v652, 0
    %v658 = vsel %vm111, %v653, 0
    %v661 = vsel %vm111, %v635, 0
    %663 = vmatprep.subr.mxu0 0.0
    %664 = vmatpush1.xpose.msra.mxu0 0.0
    %665 = vmatprep.subr.mxu0 0.0
    %666 = vmatpush1.xpose.msra.mxu0 0.0
    %667 = vmatprep.subr.mxu0 0.0
    %668 = vmatpush1.xpose.msra.mxu0 0.0
    %669 = vmatprep.subr.mxu0 0.0
    %670 = vmatpush1.xpose.msra.mxu0 0.0
    %671 = vmatprep.subr.mxu0 0.0
    %672 = vmatpush1.xpose.msra.mxu0 0.0
    %673 = vmatprep.subr.mxu0 0.0
    %674 = vmatpush1.xpose.msra.mxu0 0.0
    %675 = vmatprep.subr.mxu0 0.0
    %676 = vmatpush1.xpose.msra.mxu0 0.0
    %677 = vmatprep.subr.mxu0 0.0
    %678 = vmatpush1.xpose.msra.mxu0 0.0
    %679 = vmatprep.subr.mxu0 0.0
    %680 = vmatpush1.xpose.msra.mxu0 0.0
    %681 = vmatprep.subr.mxu0 0.0
    %682 = vmatpush1.xpose.msra.mxu0 0.0
    %683 = vmatprep.subr.mxu0 0.0
    %684 = vmatpush1.xpose.msra.mxu0 0.0
    %685 = vmatprep.subr.mxu0 0.0
    %686 = vmatpush1.xpose.msra.mxu0 0.0
    %687 = vmatprep.subr.mxu0 0.0
    %688 = vmatpush1.xpose.msra.mxu0 0.0
    %689 = vmatprep.subr.mxu0 0.0
    %690 = vmatpush1.xpose.msra.mxu0 0.0
    %691 = vmatprep.subr.mxu0 0.0
    %692 = vmatpush1.xpose.msra.mxu0 0.0
    %693 = vmatprep.subr.mxu0 0.0
    %694 = vmatpush1.xpose.msra.mxu0 %v661
    %695 = vmatprep.subr.mxu0 0.0
    %696 = vmatpush2.xpose.msra.mxu0 0.0
    %697 = vmatprep.subr.mxu0 0.0
    %698 = vmatpush2.xpose.msra.mxu0 0.0
    %699 = vmatprep.subr.mxu0 0.0
    %700 = vmatpush2.xpose.msra.mxu0 0.0
    %701 = vmatprep.subr.mxu0 0.0
    %702 = vmatpush2.xpose.msra.mxu0 0.0
    %703 = vmatprep.subr.mxu0 0.0
    %704 = vmatpush2.xpose.msra.mxu0 0.0
    %705 = vmatprep.subr.mxu0 0.0
    %706 = vmatpush2.xpose.msra.mxu0 0.0
    %707 = vmatprep.subr.mxu0 0.0
    %708 = vmatpush2.xpose.msra.mxu0 0.0
    %709 = vmatprep.subr.mxu0 0.0
    %710 = vmatpush2.xpose.msra.mxu0 0.0
    %711 = vmatprep.subr.mxu0 0.0
    %712 = vmatpush2.xpose.msra.mxu0 0.0
    %713 = vmatprep.subr.mxu0 0.0
    %714 = vmatpush2.xpose.msra.mxu0 0.0
    %715 = vmatprep.subr.mxu0 0.0
    %716 = vmatpush2.xpose.msra.mxu0 0.0
    %717 = vmatprep.subr.mxu0 0.0
    %718 = vmatpush2.xpose.msra.mxu0 0.0
    %719 = vmatprep.subr.mxu0 0.0
    %720 = vmatpush2.xpose.msra.mxu0 0.0
    %721 = vmatprep.subr.mxu0 0.0
    %722 = vmatpush2.xpose.msra.mxu0 0.0
    %723 = vmatprep.subr.mxu0 0.0
    %724 = vmatpush2.xpose.msra.mxu0 0.0
    %725 = vmatprep.subr.mxu0 0.0
    %726 = vmatpush2.xpose.msra.mxu0 0.0
    %727 = vmatprep.mubr.f32.mxu0 0.0
    %728 = vmatmul.mubr.f32.gmra.mxu0 %v655
    %v729 = vpop.f32.mrf.mxu0
    %v730 = vadd.f32 0.0, %v729
    %v731 = vpop.f32.mrf.mxu0
    %732 = vmatprep.mubr.f32.mxu0 0.0
    %733 = vmatmul.mubr.f32.gmra.mxu0 %v658
    %v734 = vpop.f32.mrf.mxu0
    %v735 = vadd.f32 0.0, %v734
    %v736 = vpop.f32.mrf.mxu0
    %737 = vdwg.mxu0
    %v739 = vsel %vm196, %v730, 0
    %v742 = vsel %vm196, %v735, 0
    %744 = vmatprep.subr.mxu0 0.0
    %745 = vmatpush1.msra.mxu0 0.0
    %746 = vmatprep.subr.mxu0 0.0
    %747 = vmatpush1.msra.mxu0 0.0
    %748 = vmatprep.subr.mxu0 0.0
    %749 = vmatpush1.msra.mxu0 0.0
    %750 = vmatprep.subr.mxu0 0.0
    %751 = vmatpush1.msra.mxu0 0.0
    %752 = vmatprep.subr.mxu0 0.0
    %753 = vmatpush1.msra.mxu0 0.0
    %754 = vmatprep.subr.mxu0 0.0
    %755 = vmatpush1.msra.mxu0 0.0
    %756 = vmatprep.subr.mxu0 0.0
    %757 = vmatpush1.msra.mxu0 0.0
    %758 = vmatprep.subr.mxu0 0.0
    %759 = vmatpush1.msra.mxu0 0.0
    %760 = vmatprep.subr.mxu0 0.0
    %761 = vmatpush1.msra.mxu0 0.0
    %762 = vmatprep.subr.mxu0 0.0
    %763 = vmatpush1.msra.mxu0 0.0
    %764 = vmatprep.subr.mxu0 0.0
    %765 = vmatpush1.msra.mxu0 0.0
    %766 = vmatprep.subr.mxu0 0.0
    %767 = vmatpush1.msra.mxu0 0.0
    %768 = vmatprep.subr.mxu0 0.0
    %769 = vmatpush1.msra.mxu0 0.0
    %770 = vmatprep.subr.mxu0 0.0
    %771 = vmatpush1.msra.mxu0 0.0
    %772 = vmatprep.subr.mxu0 0.0
    %773 = vmatpush1.msra.mxu0 0.0
    %774 = vmatprep.subr.mxu0 0.0
    %775 = vmatpush1.msra.mxu0 %v61
    %776 = vmatprep.subr.mxu0 0.0
    %777 = vmatpush2.msra.mxu0 0.0
    %778 = vmatprep.subr.mxu0 0.0
    %779 = vmatpush2.msra.mxu0 0.0
    %780 = vmatprep.subr.mxu0 0.0
    %781 = vmatpush2.msra.mxu0 0.0
    %782 = vmatprep.subr.mxu0 0.0
    %783 = vmatpush2.msra.mxu0 0.0
    %784 = vmatprep.subr.mxu0 0.0
    %785 = vmatpush2.msra.mxu0 0.0
    %786 = vmatprep.subr.mxu0 0.0
    %787 = vmatpush2.msra.mxu0 0.0
    %788 = vmatprep.subr.mxu0 0.0
    %789 = vmatpush2.msra.mxu0 0.0
    %790 = vmatprep.subr.mxu0 0.0
    %791 = vmatpush2.msra.mxu0 0.0
    %792 = vmatprep.subr.mxu0 0.0
    %793 = vmatpush2.msra.mxu0 0.0
    %794 = vmatprep.subr.mxu0 0.0
    %795 = vmatpush2.msra.mxu0 0.0
    %796 = vmatprep.subr.mxu0 0.0
    %797 = vmatpush2.msra.mxu0 0.0
    %798 = vmatprep.subr.mxu0 0.0
    %799 = vmatpush2.msra.mxu0 0.0
    %800 = vmatprep.subr.mxu0 0.0
    %801 = vmatpush2.msra.mxu0 0.0
    %802 = vmatprep.subr.mxu0 0.0
    %803 = vmatpush2.msra.mxu0 0.0
    %804 = vmatprep.subr.mxu0 0.0
    %805 = vmatpush2.msra.mxu0 0.0
    %806 = vmatprep.subr.mxu0 0.0
    %807 = vmatpush2.msra.mxu0 0.0
    %808 = vmatprep.mubr.f32.mxu0 0.0
    %809 = vmatmul.mubr.f32.gmra.mxu0 %v739
    %v810 = vpop.f32.mrf.mxu0
    %v811 = vadd.f32 0.0, %v810
    %v812 = vpop.f32.mrf.mxu0
    %813 = vmatprep.mubr.f32.mxu0 0.0
    %814 = vmatmul.mubr.f32.gmra.mxu0 %v742
    %v815 = vpop.f32.mrf.mxu0
    %v816 = vadd.f32 0.0, %v815
    %v817 = vpop.f32.mrf.mxu0
    %818 = vdwg.mxu0
    %v819 = vmul.f32 %v645, %v811
    %v820 = vmul.f32 %v646, %v816
    %v822 = vsel %vm111, %v72, 0
    %824 = vmatprep.subr.mxu0 0.0
    %825 = vmatpush1.msra.mxu0 0.0
    %826 = vmatprep.subr.mxu0 0.0
    %827 = vmatpush1.msra.mxu0 0.0
    %828 = vmatprep.subr.mxu0 0.0
    %829 = vmatpush1.msra.mxu0 0.0
    %830 = vmatprep.subr.mxu0 0.0
    %831 = vmatpush1.msra.mxu0 0.0
    %832 = vmatprep.subr.mxu0 0.0
    %833 = vmatpush1.msra.mxu0 0.0
    %834 = vmatprep.subr.mxu0 0.0
    %835 = vmatpush1.msra.mxu0 0.0
    %836 = vmatprep.subr.mxu0 0.0
    %837 = vmatpush1.msra.mxu0 0.0
    %838 = vmatprep.subr.mxu0 0.0
    %839 = vmatpush1.msra.mxu0 0.0
    %840 = vmatprep.subr.mxu0 0.0
    %841 = vmatpush1.msra.mxu0 0.0
    %842 = vmatprep.subr.mxu0 0.0
    %843 = vmatpush1.msra.mxu0 0.0
    %844 = vmatprep.subr.mxu0 0.0
    %845 = vmatpush1.msra.mxu0 0.0
    %846 = vmatprep.subr.mxu0 0.0
    %847 = vmatpush1.msra.mxu0 0.0
    %848 = vmatprep.subr.mxu0 0.0
    %849 = vmatpush1.msra.mxu0 0.0
    %850 = vmatprep.subr.mxu0 0.0
    %851 = vmatpush1.msra.mxu0 0.0
    %852 = vmatprep.subr.mxu0 0.0
    %853 = vmatpush1.msra.mxu0 %v820
    %854 = vmatprep.subr.mxu0 0.0
    %855 = vmatpush1.msra.mxu0 %v819
    %856 = vmatprep.subr.mxu0 0.0
    %857 = vmatpush2.msra.mxu0 0.0
    %858 = vmatprep.subr.mxu0 0.0
    %859 = vmatpush2.msra.mxu0 0.0
    %860 = vmatprep.subr.mxu0 0.0
    %861 = vmatpush2.msra.mxu0 0.0
    %862 = vmatprep.subr.mxu0 0.0
    %863 = vmatpush2.msra.mxu0 0.0
    %864 = vmatprep.subr.mxu0 0.0
    %865 = vmatpush2.msra.mxu0 0.0
    %866 = vmatprep.subr.mxu0 0.0
    %867 = vmatpush2.msra.mxu0 0.0
    %868 = vmatprep.subr.mxu0 0.0
    %869 = vmatpush2.msra.mxu0 0.0
    %870 = vmatprep.subr.mxu0 0.0
    %871 = vmatpush2.msra.mxu0 0.0
    %872 = vmatprep.subr.mxu0 0.0
    %873 = vmatpush2.msra.mxu0 0.0
    %874 = vmatprep.subr.mxu0 0.0
    %875 = vmatpush2.msra.mxu0 0.0
    %876 = vmatprep.subr.mxu0 0.0
    %877 = vmatpush2.msra.mxu0 0.0
    %878 = vmatprep.subr.mxu0 0.0
    %879 = vmatpush2.msra.mxu0 0.0
    %880 = vmatprep.subr.mxu0 0.0
    %881 = vmatpush2.msra.mxu0 0.0
    %882 = vmatprep.subr.mxu0 0.0
    %883 = vmatpush2.msra.mxu0 0.0
    %884 = vmatprep.subr.mxu0 0.0
    %885 = vmatpush2.msra.mxu0 0.0
    %886 = vmatprep.subr.mxu0 0.0
    %887 = vmatpush2.msra.mxu0 0.0
    %888 = vmatprep.mubr.f32.mxu0 0.0
    %889 = vmatmul.mubr.f32.gmra.mxu0 %v822
    %v890 = vpop.f32.mrf.mxu0
    %v891 = vadd.f32 0.0, %v890
    %v892 = vpop.f32.mrf.mxu0
    %893 = vdwg.mxu0
    %v894 = vadd.f32 %v621, %v891
    %s895 = sadd.s32 %s280, 3
    %s896 = smul.u32 %s895, 2
    %s897 = sld [smem:[#allocation3 + %s896]]
    %s898 = sadd.s32 %s896, 1
    %s899 = sld [smem:[#allocation3 + %s898]]
    %v900 = vstv %s897
    %vm901 = vcmp.eq.s32.totalorder %v66, %v900
    %s902 = sadd.s32 %s897, 1
    %v903 = vstv %s902
    %vm904 = vcmp.eq.s32.totalorder %v66, %v903
    %vm905 = vmor %vm901, %vm904
    %v906 = vsel %vm905, 0.5, 0.0
    %v907 = vstv %s899
    %vm908 = vcmp.eq.s32.totalorder %v59, %v907
    %vm909 = vcmp.eq.s32.totalorder %v60, %v907
    %s910 = sadd.s32 %s899, 1
    %v911 = vstv %s910
    %vm912 = vcmp.eq.s32.totalorder %v59, %v911
    %vm913 = vcmp.eq.s32.totalorder %v60, %v911
    %vm914 = vmor %vm908, %vm912
    %vm915 = vmor %vm909, %vm913
    %v916 = vsel %vm914, 0.5, 0.0
    %v917 = vsel %vm915, 0.5, 0.0
    %s918 = scalar_lea.vmem [#allocation9], 24
    %v919 = vld [vmem:[%s918] sm:$0xf]
    %v920 = vld [vmem:[%s918 + $0x4] sm:$0xf]
    %v921 = vunpack.c.l.b16 %v919
    %v922 = vunpack.c.l.b16 %v920
    %v923 = vcvt.s32.f32 %v921
    %v924 = vcvt.s32.f32 %v922
    %v926 = vsel %vm111, %v923, 0
    %v929 = vsel %vm111, %v924, 0
    %v932 = vsel %vm111, %v906, 0
    %934 = vmatprep.subr.mxu0 0.0
    %935 = vmatpush1.xpose.msra.mxu0 0.0
    %936 = vmatprep.subr.mxu0 0.0
    %937 = vmatpush1.xpose.msra.mxu0 0.0
    %938 = vmatprep.subr.mxu0 0.0
    %939 = vmatpush1.xpose.msra.mxu0 0.0
    %940 = vmatprep.subr.mxu0 0.0
    %941 = vmatpush1.xpose.msra.mxu0 0.0
    %942 = vmatprep.subr.mxu0 0.0
    %943 = vmatpush1.xpose.msra.mxu0 0.0
    %944 = vmatprep.subr.mxu0 0.0
    %945 = vmatpush1.xpose.msra.mxu0 0.0
    %946 = vmatprep.subr.mxu0 0.0
    %947 = vmatpush1.xpose.msra.mxu0 0.0
    %948 = vmatprep.subr.mxu0 0.0
    %949 = vmatpush1.xpose.msra.mxu0 0.0
    %950 = vmatprep.subr.mxu0 0.0
    %951 = vmatpush1.xpose.msra.mxu0 0.0
    %952 = vmatprep.subr.mxu0 0.0
    %953 = vmatpush1.xpose.msra.mxu0 0.0
    %954 = vmatprep.subr.mxu0 0.0
    %955 = vmatpush1.xpose.msra.mxu0 0.0
    %956 = vmatprep.subr.mxu0 0.0
    %957 = vmatpush1.xpose.msra.mxu0 0.0
    %958 = vmatprep.subr.mxu0 0.0
    %959 = vmatpush1.xpose.msra.mxu0 0.0
    %960 = vmatprep.subr.mxu0 0.0
    %961 = vmatpush1.xpose.msra.mxu0 0.0
    %962 = vmatprep.subr.mxu0 0.0
    %963 = vmatpush1.xpose.msra.mxu0 0.0
    %964 = vmatprep.subr.mxu0 0.0
    %965 = vmatpush1.xpose.msra.mxu0 %v932
    %966 = vmatprep.subr.mxu0 0.0
    %967 = vmatpush2.xpose.msra.mxu0 0.0
    %968 = vmatprep.subr.mxu0 0.0
    %969 = vmatpush2.xpose.msra.mxu0 0.0
    %970 = vmatprep.subr.mxu0 0.0
    %971 = vmatpush2.xpose.msra.mxu0 0.0
    %972 = vmatprep.subr.mxu0 0.0
    %973 = vmatpush2.xpose.msra.mxu0 0.0
    %974 = vmatprep.subr.mxu0 0.0
    %975 = vmatpush2.xpose.msra.mxu0 0.0
    %976 = vmatprep.subr.mxu0 0.0
    %977 = vmatpush2.xpose.msra.mxu0 0.0
    %978 = vmatprep.subr.mxu0 0.0
    %979 = vmatpush2.xpose.msra.mxu0 0.0
    %980 = vmatprep.subr.mxu0 0.0
    %981 = vmatpush2.xpose.msra.mxu0 0.0
    %982 = vmatprep.subr.mxu0 0.0
    %983 = vmatpush2.xpose.msra.mxu0 0.0
    %984 = vmatprep.subr.mxu0 0.0
    %985 = vmatpush2.xpose.msra.mxu0 0.0
    %986 = vmatprep.subr.mxu0 0.0
    %987 = vmatpush2.xpose.msra.mxu0 0.0
    %988 = vmatprep.subr.mxu0 0.0
    %989 = vmatpush2.xpose.msra.mxu0 0.0
    %990 = vmatprep.subr.mxu0 0.0
    %991 = vmatpush2.xpose.msra.mxu0 0.0
    %992 = vmatprep.subr.mxu0 0.0
    %993 = vmatpush2.xpose.msra.mxu0 0.0
    %994 = vmatprep.subr.mxu0 0.0
    %995 = vmatpush2.xpose.msra.mxu0 0.0
    %996 = vmatprep.subr.mxu0 0.0
    %997 = vmatpush2.xpose.msra.mxu0 0.0
    %998 = vmatprep.mubr.f32.mxu0 0.0
    %999 = vmatmul.mubr.f32.gmra.mxu0 %v926
    %v1000 = vpop.f32.mrf.mxu0
    %v1001 = vadd.f32 0.0, %v1000
    %v1002 = vpop.f32.mrf.mxu0
    %1003 = vmatprep.mubr.f32.mxu0 0.0
    %1004 = vmatmul.mubr.f32.gmra.mxu0 %v929
    %v1005 = vpop.f32.mrf.mxu0
    %v1006 = vadd.f32 0.0, %v1005
    %v1007 = vpop.f32.mrf.mxu0
    %1008 = vdwg.mxu0
    %v1010 = vsel %vm196, %v1001, 0
    %v1013 = vsel %vm196, %v1006, 0
    %1015 = vmatprep.subr.mxu0 0.0
    %1016 = vmatpush1.msra.mxu0 0.0
    %1017 = vmatprep.subr.mxu0 0.0
    %1018 = vmatpush1.msra.mxu0 0.0
    %1019 = vmatprep.subr.mxu0 0.0
    %1020 = vmatpush1.msra.mxu0 0.0
    %1021 = vmatprep.subr.mxu0 0.0
    %1022 = vmatpush1.msra.mxu0 0.0
    %1023 = vmatprep.subr.mxu0 0.0
    %1024 = vmatpush1.msra.mxu0 0.0
    %1025 = vmatprep.subr.mxu0 0.0
    %1026 = vmatpush1.msra.mxu0 0.0
    %1027 = vmatprep.subr.mxu0 0.0
    %1028 = vmatpush1.msra.mxu0 0.0
    %1029 = vmatprep.subr.mxu0 0.0
    %1030 = vmatpush1.msra.mxu0 0.0
    %1031 = vmatprep.subr.mxu0 0.0
    %1032 = vmatpush1.msra.mxu0 0.0
    %1033 = vmatprep.subr.mxu0 0.0
    %1034 = vmatpush1.msra.mxu0 0.0
    %1035 = vmatprep.subr.mxu0 0.0
    %1036 = vmatpush1.msra.mxu0 0.0
    %1037 = vmatprep.subr.mxu0 0.0
    %1038 = vmatpush1.msra.mxu0 0.0
    %1039 = vmatprep.subr.mxu0 0.0
    %1040 = vmatpush1.msra.mxu0 0.0
    %1041 = vmatprep.subr.mxu0 0.0
    %1042 = vmatpush1.msra.mxu0 0.0
    %1043 = vmatprep.subr.mxu0 0.0
    %1044 = vmatpush1.msra.mxu0 0.0
    %1045 = vmatprep.subr.mxu0 0.0
    %1046 = vmatpush1.msra.mxu0 %v61
    %1047 = vmatprep.subr.mxu0 0.0
    %1048 = vmatpush2.msra.mxu0 0.0
    %1049 = vmatprep.subr.mxu0 0.0
    %1050 = vmatpush2.msra.mxu0 0.0
    %1051 = vmatprep.subr.mxu0 0.0
    %1052 = vmatpush2.msra.mxu0 0.0
    %1053 = vmatprep.subr.mxu0 0.0
    %1054 = vmatpush2.msra.mxu0 0.0
    %1055 = vmatprep.subr.mxu0 0.0
    %1056 = vmatpush2.msra.mxu0 0.0
    %1057 = vmatprep.subr.mxu0 0.0
    %1058 = vmatpush2.msra.mxu0 0.0
    %1059 = vmatprep.subr.mxu0 0.0
    %1060 = vmatpush2.msra.mxu0 0.0
    %1061 = vmatprep.subr.mxu0 0.0
    %1062 = vmatpush2.msra.mxu0 0.0
    %1063 = vmatprep.subr.mxu0 0.0
    %1064 = vmatpush2.msra.mxu0 0.0
    %1065 = vmatprep.subr.mxu0 0.0
    %1066 = vmatpush2.msra.mxu0 0.0
    %1067 = vmatprep.subr.mxu0 0.0
    %1068 = vmatpush2.msra.mxu0 0.0
    %1069 = vmatprep.subr.mxu0 0.0
    %1070 = vmatpush2.msra.mxu0 0.0
    %1071 = vmatprep.subr.mxu0 0.0
    %1072 = vmatpush2.msra.mxu0 0.0
    %1073 = vmatprep.subr.mxu0 0.0
    %1074 = vmatpush2.msra.mxu0 0.0
    %1075 = vmatprep.subr.mxu0 0.0
    %1076 = vmatpush2.msra.mxu0 0.0
    %1077 = vmatprep.subr.mxu0 0.0
    %1078 = vmatpush2.msra.mxu0 0.0
    %1079 = vmatprep.mubr.f32.mxu0 0.0
    %1080 = vmatmul.mubr.f32.gmra.mxu0 %v1010
    %v1081 = vpop.f32.mrf.mxu0
    %v1082 = vadd.f32 0.0, %v1081
    %v1083 = vpop.f32.mrf.mxu0
    %1084 = vmatprep.mubr.f32.mxu0 0.0
    %1085 = vmatmul.mubr.f32.gmra.mxu0 %v1013
    %v1086 = vpop.f32.mrf.mxu0
    %v1087 = vadd.f32 0.0, %v1086
    %v1088 = vpop.f32.mrf.mxu0
    %1089 = vdwg.mxu0
    %v1090 = vmul.f32 %v916, %v1082
    %v1091 = vmul.f32 %v917, %v1087
    %v1093 = vsel %vm111, %v74, 0
    %1095 = vmatprep.subr.mxu0 0.0
    %1096 = vmatpush1.msra.mxu0 0.0
    %1097 = vmatprep.subr.mxu0 0.0
    %1098 = vmatpush1.msra.mxu0 0.0
    %1099 = vmatprep.subr.mxu0 0.0
    %1100 = vmatpush1.msra.mxu0 0.0
    %1101 = vmatprep.subr.mxu0 0.0
    %1102 = vmatpush1.msra.mxu0 0.0
    %1103 = vmatprep.subr.mxu0 0.0
    %1104 = vmatpush1.msra.mxu0 0.0
    %1105 = vmatprep.subr.mxu0 0.0
    %1106 = vmatpush1.msra.mxu0 0.0
    %1107 = vmatprep.subr.mxu0 0.0
    %1108 = vmatpush1.msra.mxu0 0.0
    %1109 = vmatprep.subr.mxu0 0.0
    %1110 = vmatpush1.msra.mxu0 0.0
    %1111 = vmatprep.subr.mxu0 0.0
    %1112 = vmatpush1.msra.mxu0 0.0
    %1113 = vmatprep.subr.mxu0 0.0
    %1114 = vmatpush1.msra.mxu0 0.0
    %1115 = vmatprep.subr.mxu0 0.0
    %1116 = vmatpush1.msra.mxu0 0.0
    %1117 = vmatprep.subr.mxu0 0.0
    %1118 = vmatpush1.msra.mxu0 0.0
    %1119 = vmatprep.subr.mxu0 0.0
    %1120 = vmatpush1.msra.mxu0 0.0
    %1121 = vmatprep.subr.mxu0 0.0
    %1122 = vmatpush1.msra.mxu0 0.0
    %1123 = vmatprep.subr.mxu0 0.0
    %1124 = vmatpush1.msra.mxu0 %v1091
    %1125 = vmatprep.subr.mxu0 0.0
    %1126 = vmatpush1.msra.mxu0 %v1090
    %1127 = vmatprep.subr.mxu0 0.0
    %1128 = vmatpush2.msra.mxu0 0.0
    %1129 = vmatprep.subr.mxu0 0.0
    %1130 = vmatpush2.msra.mxu0 0.0
    %1131 = vmatprep.subr.mxu0 0.0
    %1132 = vmatpush2.msra.mxu0 0.0
    %1133 = vmatprep.subr.mxu0 0.0
    %1134 = vmatpush2.msra.mxu0 0.0
    %1135 = vmatprep.subr.mxu0 0.0
    %1136 = vmatpush2.msra.mxu0 0.0
    %1137 = vmatprep.subr.mxu0 0.0
    %1138 = vmatpush2.msra.mxu0 0.0
    %1139 = vmatprep.subr.mxu0 0.0
    %1140 = vmatpush2.msra.mxu0 0.0
    %1141 = vmatprep.subr.mxu0 0.0
    %1142 = vmatpush2.msra.mxu0 0.0
    %1143 = vmatprep.subr.mxu0 0.0
    %1144 = vmatpush2.msra.mxu0 0.0
    %1145 = vmatprep.subr.mxu0 0.0
    %1146 = vmatpush2.msra.mxu0 0.0
    %1147 = vmatprep.subr.mxu0 0.0
    %1148 = vmatpush2.msra.mxu0 0.0
    %1149 = vmatprep.subr.mxu0 0.0
    %1150 = vmatpush2.msra.mxu0 0.0
    %1151 = vmatprep.subr.mxu0 0.0
    %1152 = vmatpush2.msra.mxu0 0.0
    %1153 = vmatprep.subr.mxu0 0.0
    %1154 = vmatpush2.msra.mxu0 0.0
    %1155 = vmatprep.subr.mxu0 0.0
    %1156 = vmatpush2.msra.mxu0 0.0
    %1157 = vmatprep.subr.mxu0 0.0
    %1158 = vmatpush2.msra.mxu0 0.0
    %1159 = vmatprep.mubr.f32.mxu0 0.0
    %1160 = vmatmul.mubr.f32.gmra.mxu0 %v1093
    %v1161 = vpop.f32.mrf.mxu0
    %v1162 = vadd.f32 0.0, %v1161
    %v1163 = vpop.f32.mrf.mxu0
    %1164 = vdwg.mxu0
    %v1165 = vadd.f32 %v894, %v1162
    %s1166 = sadd.s32 %s280, 4
    %s1167 = smul.u32 %s1166, 2
    %s1168 = sld [smem:[#allocation3 + %s1167]]
    %s1169 = sadd.s32 %s1167, 1
    %s1170 = sld [smem:[#allocation3 + %s1169]]
    %v1171 = vstv %s1168
    %vm1172 = vcmp.eq.s32.totalorder %v66, %v1171
    %s1173 = sadd.s32 %s1168, 1
    %v1174 = vstv %s1173
    %vm1175 = vcmp.eq.s32.totalorder %v66, %v1174
    %vm1176 = vmor %vm1172, %vm1175
    %v1177 = vsel %vm1176, 0.5, 0.0
    %v1178 = vstv %s1170
    %vm1179 = vcmp.eq.s32.totalorder %v59, %v1178
    %vm1180 = vcmp.eq.s32.totalorder %v60, %v1178
    %s1181 = sadd.s32 %s1170, 1
    %v1182 = vstv %s1181
    %vm1183 = vcmp.eq.s32.totalorder %v59, %v1182
    %vm1184 = vcmp.eq.s32.totalorder %v60, %v1182
    %vm1185 = vmor %vm1179, %vm1183
    %vm1186 = vmor %vm1180, %vm1184
    %v1187 = vsel %vm1185, 0.5, 0.0
    %v1188 = vsel %vm1186, 0.5, 0.0
    %s1189 = scalar_lea.vmem [#allocation9], 32
    %v1190 = vld [vmem:[%s1189] sm:$0xf]
    %v1191 = vld [vmem:[%s1189 + $0x4] sm:$0xf]
    %v1192 = vunpack.c.l.b16 %v1190
    %v1193 = vunpack.c.l.b16 %v1191
    %v1194 = vcvt.s32.f32 %v1192
    %v1195 = vcvt.s32.f32 %v1193
    %v1197 = vsel %vm111, %v1194, 0
    %v1200 = vsel %vm111, %v1195, 0
    %v1203 = vsel %vm111, %v1177, 0
    %1205 = vmatprep.subr.mxu0 0.0
    %1206 = vmatpush1.xpose.msra.mxu0 0.0
    %1207 = vmatprep.subr.mxu0 0.0
    %1208 = vmatpush1.xpose.msra.mxu0 0.0
    %1209 = vmatprep.subr.mxu0 0.0
    %1210 = vmatpush1.xpose.msra.mxu0 0.0
    %1211 = vmatprep.subr.mxu0 0.0
    %1212 = vmatpush1.xpose.msra.mxu0 0.0
    %1213 = vmatprep.subr.mxu0 0.0
    %1214 = vmatpush1.xpose.msra.mxu0 0.0
    %1215 = vmatprep.subr.mxu0 0.0
    %1216 = vmatpush1.xpose.msra.mxu0 0.0
    %1217 = vmatprep.subr.mxu0 0.0
    %1218 = vmatpush1.xpose.msra.mxu0 0.0
    %1219 = vmatprep.subr.mxu0 0.0
    %1220 = vmatpush1.xpose.msra.mxu0 0.0
    %1221 = vmatprep.subr.mxu0 0.0
    %1222 = vmatpush1.xpose.msra.mxu0 0.0
    %1223 = vmatprep.subr.mxu0 0.0
    %1224 = vmatpush1.xpose.msra.mxu0 0.0
    %1225 = vmatprep.subr.mxu0 0.0
    %1226 = vmatpush1.xpose.msra.mxu0 0.0
    %1227 = vmatprep.subr.mxu0 0.0
    %1228 = vmatpush1.xpose.msra.mxu0 0.0
    %1229 = vmatprep.subr.mxu0 0.0
    %1230 = vmatpush1.xpose.msra.mxu0 0.0
    %1231 = vmatprep.subr.mxu0 0.0
    %1232 = vmatpush1.xpose.msra.mxu0 0.0
    %1233 = vmatprep.subr.mxu0 0.0
    %1234 = vmatpush1.xpose.msra.mxu0 0.0
    %1235 = vmatprep.subr.mxu0 0.0
    %1236 = vmatpush1.xpose.msra.mxu0 %v1203
    %1237 = vmatprep.subr.mxu0 0.0
    %1238 = vmatpush2.xpose.msra.mxu0 0.0
    %1239 = vmatprep.subr.mxu0 0.0
    %1240 = vmatpush2.xpose.msra.mxu0 0.0
    %1241 = vmatprep.subr.mxu0 0.0
    %1242 = vmatpush2.xpose.msra.mxu0 0.0
    %1243 = vmatprep.subr.mxu0 0.0
    %1244 = vmatpush2.xpose.msra.mxu0 0.0
    %1245 = vmatprep.subr.mxu0 0.0
    %1246 = vmatpush2.xpose.msra.mxu0 0.0
    %1247 = vmatprep.subr.mxu0 0.0
    %1248 = vmatpush2.xpose.msra.mxu0 0.0
    %1249 = vmatprep.subr.mxu0 0.0
    %1250 = vmatpush2.xpose.msra.mxu0 0.0
    %1251 = vmatprep.subr.mxu0 0.0
    %1252 = vmatpush2.xpose.msra.mxu0 0.0
    %1253 = vmatprep.subr.mxu0 0.0
    %1254 = vmatpush2.xpose.msra.mxu0 0.0
    %1255 = vmatprep.subr.mxu0 0.0
    %1256 = vmatpush2.xpose.msra.mxu0 0.0
    %1257 = vmatprep.subr.mxu0 0.0
    %1258 = vmatpush2.xpose.msra.mxu0 0.0
    %1259 = vmatprep.subr.mxu0 0.0
    %1260 = vmatpush2.xpose.msra.mxu0 0.0
    %1261 = vmatprep.subr.mxu0 0.0
    %1262 = vmatpush2.xpose.msra.mxu0 0.0
    %1263 = vmatprep.subr.mxu0 0.0
    %1264 = vmatpush2.xpose.msra.mxu0 0.0
    %1265 = vmatprep.subr.mxu0 0.0
    %1266 = vmatpush2.xpose.msra.mxu0 0.0
    %1267 = vmatprep.subr.mxu0 0.0
    %1268 = vmatpush2.xpose.msra.mxu0 0.0
    %1269 = vmatprep.mubr.f32.mxu0 0.0
    %1270 = vmatmul.mubr.f32.gmra.mxu0 %v1197
    %v1271 = vpop.f32.mrf.mxu0
    %v1272 = vadd.f32 0.0, %v1271
    %v1273 = vpop.f32.mrf.mxu0
    %1274 = vmatprep.mubr.f32.mxu0 0.0
    %1275 = vmatmul.mubr.f32.gmra.mxu0 %v1200
    %v1276 = vpop.f32.mrf.mxu0
    %v1277 = vadd.f32 0.0, %v1276
    %v1278 = vpop.f32.mrf.mxu0
    %1279 = vdwg.mxu0
    %v1281 = vsel %vm196, %v1272, 0
    %v1284 = vsel %vm196, %v1277, 0
    %1286 = vmatprep.subr.mxu0 0.0
    %1287 = vmatpush1.msra.mxu0 0.0
    %1288 = vmatprep.subr.mxu0 0.0
    %1289 = vmatpush1.msra.mxu0 0.0
    %1290 = vmatprep.subr.mxu0 0.0
    %1291 = vmatpush1.msra.mxu0 0.0
    %1292 = vmatprep.subr.mxu0 0.0
    %1293 = vmatpush1.msra.mxu0 0.0
    %1294 = vmatprep.subr.mxu0 0.0
    %1295 = vmatpush1.msra.mxu0 0.0
    %1296 = vmatprep.subr.mxu0 0.0
    %1297 = vmatpush1.msra.mxu0 0.0
    %1298 = vmatprep.subr.mxu0 0.0
    %1299 = vmatpush1.msra.mxu0 0.0
    %1300 = vmatprep.subr.mxu0 0.0
    %1301 = vmatpush1.msra.mxu0 0.0
    %1302 = vmatprep.subr.mxu0 0.0
    %1303 = vmatpush1.msra.mxu0 0.0
    %1304 = vmatprep.subr.mxu0 0.0
    %1305 = vmatpush1.msra.mxu0 0.0
    %1306 = vmatprep.subr.mxu0 0.0
    %1307 = vmatpush1.msra.mxu0 0.0
    %1308 = vmatprep.subr.mxu0 0.0
    %1309 = vmatpush1.msra.mxu0 0.0
    %1310 = vmatprep.subr.mxu0 0.0
    %1311 = vmatpush1.msra.mxu0 0.0
    %1312 = vmatprep.subr.mxu0 0.0
    %1313 = vmatpush1.msra.mxu0 0.0
    %1314 = vmatprep.subr.mxu0 0.0
    %1315 = vmatpush1.msra.mxu0 0.0
    %1316 = vmatprep.subr.mxu0 0.0
    %1317 = vmatpush1.msra.mxu0 %v61
    %1318 = vmatprep.subr.mxu0 0.0
    %1319 = vmatpush2.msra.mxu0 0.0
    %1320 = vmatprep.subr.mxu0 0.0
    %1321 = vmatpush2.msra.mxu0 0.0
    %1322 = vmatprep.subr.mxu0 0.0
    %1323 = vmatpush2.msra.mxu0 0.0
    %1324 = vmatprep.subr.mxu0 0.0
    %1325 = vmatpush2.msra.mxu0 0.0
    %1326 = vmatprep.subr.mxu0 0.0
    %1327 = vmatpush2.msra.mxu0 0.0
    %1328 = vmatprep.subr.mxu0 0.0
    %1329 = vmatpush2.msra.mxu0 0.0
    %1330 = vmatprep.subr.mxu0 0.0
    %1331 = vmatpush2.msra.mxu0 0.0
    %1332 = vmatprep.subr.mxu0 0.0
    %1333 = vmatpush2.msra.mxu0 0.0
    %1334 = vmatprep.subr.mxu0 0.0
    %1335 = vmatpush2.msra.mxu0 0.0
    %1336 = vmatprep.subr.mxu0 0.0
    %1337 = vmatpush2.msra.mxu0 0.0
    %1338 = vmatprep.subr.mxu0 0.0
    %1339 = vmatpush2.msra.mxu0 0.0
    %1340 = vmatprep.subr.mxu0 0.0
    %1341 = vmatpush2.msra.mxu0 0.0
    %1342 = vmatprep.subr.mxu0 0.0
    %1343 = vmatpush2.msra.mxu0 0.0
    %1344 = vmatprep.subr.mxu0 0.0
    %1345 = vmatpush2.msra.mxu0 0.0
    %1346 = vmatprep.subr.mxu0 0.0
    %1347 = vmatpush2.msra.mxu0 0.0
    %1348 = vmatprep.subr.mxu0 0.0
    %1349 = vmatpush2.msra.mxu0 0.0
    %1350 = vmatprep.mubr.f32.mxu0 0.0
    %1351 = vmatmul.mubr.f32.gmra.mxu0 %v1281
    %v1352 = vpop.f32.mrf.mxu0
    %v1353 = vadd.f32 0.0, %v1352
    %v1354 = vpop.f32.mrf.mxu0
    %1355 = vmatprep.mubr.f32.mxu0 0.0
    %1356 = vmatmul.mubr.f32.gmra.mxu0 %v1284
    %v1357 = vpop.f32.mrf.mxu0
    %v1358 = vadd.f32 0.0, %v1357
    %v1359 = vpop.f32.mrf.mxu0
    %1360 = vdwg.mxu0
    %v1361 = vmul.f32 %v1187, %v1353
    %v1362 = vmul.f32 %v1188, %v1358
    %v1364 = vsel %vm111, %v76, 0
    %1366 = vmatprep.subr.mxu0 0.0
    %1367 = vmatpush1.msra.mxu0 0.0
    %1368 = vmatprep.subr.mxu0 0.0
    %1369 = vmatpush1.msra.mxu0 0.0
    %1370 = vmatprep.subr.mxu0 0.0
    %1371 = vmatpush1.msra.mxu0 0.0
    %1372 = vmatprep.subr.mxu0 0.0
    %1373 = vmatpush1.msra.mxu0 0.0
    %1374 = vmatprep.subr.mxu0 0.0
    %1375 = vmatpush1.msra.mxu0 0.0
    %1376 = vmatprep.subr.mxu0 0.0
    %1377 = vmatpush1.msra.mxu0 0.0
    %1378 = vmatprep.subr.mxu0 0.0
    %1379 = vmatpush1.msra.mxu0 0.0
    %1380 = vmatprep.subr.mxu0 0.0
    %1381 = vmatpush1.msra.mxu0 0.0
    %1382 = vmatprep.subr.mxu0 0.0
    %1383 = vmatpush1.msra.mxu0 0.0
    %1384 = vmatprep.subr.mxu0 0.0
    %1385 = vmatpush1.msra.mxu0 0.0
    %1386 = vmatprep.subr.mxu0 0.0
    %1387 = vmatpush1.msra.mxu0 0.0
    %1388 = vmatprep.subr.mxu0 0.0
    %1389 = vmatpush1.msra.mxu0 0.0
    %1390 = vmatprep.subr.mxu0 0.0
    %1391 = vmatpush1.msra.mxu0 0.0
    %1392 = vmatprep.subr.mxu0 0.0
    %1393 = vmatpush1.msra.mxu0 0.0
    %1394 = vmatprep.subr.mxu0 0.0
    %1395 = vmatpush1.msra.mxu0 %v1362
    %1396 = vmatprep.subr.mxu0 0.0
    %1397 = vmatpush1.msra.mxu0 %v1361
    %1398 = vmatprep.subr.mxu0 0.0
    %1399 = vmatpush2.msra.mxu0 0.0
    %1400 = vmatprep.subr.mxu0 0.0
    %1401 = vmatpush2.msra.mxu0 0.0
    %1402 = vmatprep.subr.mxu0 0.0
    %1403 = vmatpush2.msra.mxu0 0.0
    %1404 = vmatprep.subr.mxu0 0.0
    %1405 = vmatpush2.msra.mxu0 0.0
    %1406 = vmatprep.subr.mxu0 0.0
    %1407 = vmatpush2.msra.mxu0 0.0
    %1408 = vmatprep.subr.mxu0 0.0
    %1409 = vmatpush2.msra.mxu0 0.0
    %1410 = vmatprep.subr.mxu0 0.0
    %1411 = vmatpush2.msra.mxu0 0.0
    %1412 = vmatprep.subr.mxu0 0.0
    %1413 = vmatpush2.msra.mxu0 0.0
    %1414 = vmatprep.subr.mxu0 0.0
    %1415 = vmatpush2.msra.mxu0 0.0
    %1416 = vmatprep.subr.mxu0 0.0
    %1417 = vmatpush2.msra.mxu0 0.0
    %1418 = vmatprep.subr.mxu0 0.0
    %1419 = vmatpush2.msra.mxu0 0.0
    %1420 = vmatprep.subr.mxu0 0.0
    %1421 = vmatpush2.msra.mxu0 0.0
    %1422 = vmatprep.subr.mxu0 0.0
    %1423 = vmatpush2.msra.mxu0 0.0
    %1424 = vmatprep.subr.mxu0 0.0
    %1425 = vmatpush2.msra.mxu0 0.0
    %1426 = vmatprep.subr.mxu0 0.0
    %1427 = vmatpush2.msra.mxu0 0.0
    %1428 = vmatprep.subr.mxu0 0.0
    %1429 = vmatpush2.msra.mxu0 0.0
    %1430 = vmatprep.mubr.f32.mxu0 0.0
    %1431 = vmatmul.mubr.f32.gmra.mxu0 %v1364
    %v1432 = vpop.f32.mrf.mxu0
    %v1433 = vadd.f32 0.0, %v1432
    %v1434 = vpop.f32.mrf.mxu0
    %1435 = vdwg.mxu0
    %v1436 = vadd.f32 %v1165, %v1433
    %s1437 = sadd.s32 %s280, 5
    %s1438 = smul.u32 %s1437, 2
    %s1439 = sld [smem:[#allocation3 + %s1438]]
    %s1440 = sadd.s32 %s1438, 1
    %s1441 = sld [smem:[#allocation3 + %s1440]]
    %v1442 = vstv %s1439
    %vm1443 = vcmp.eq.s32.totalorder %v66, %v1442
    %s1444 = sadd.s32 %s1439, 1
    %v1445 = vstv %s1444
    %vm1446 = vcmp.eq.s32.totalorder %v66, %v1445
    %vm1447 = vmor %vm1443, %vm1446
    %v1448 = vsel %vm1447, 0.5, 0.0
    %v1449 = vstv %s1441
    %vm1450 = vcmp.eq.s32.totalorder %v59, %v1449
    %vm1451 = vcmp.eq.s32.totalorder %v60, %v1449
    %s1452 = sadd.s32 %s1441, 1
    %v1453 = vstv %s1452
    %vm1454 = vcmp.eq.s32.totalorder %v59, %v1453
    %vm1455 = vcmp.eq.s32.totalorder %v60, %v1453
    %vm1456 = vmor %vm1450, %vm1454
    %vm1457 = vmor %vm1451, %vm1455
    %v1458 = vsel %vm1456, 0.5, 0.0
    %v1459 = vsel %vm1457, 0.5, 0.0
    %s1460 = scalar_lea.vmem [#allocation9], 40
    %v1461 = vld [vmem:[%s1460] sm:$0xf]
    %v1462 = vld [vmem:[%s1460 + $0x4] sm:$0xf]
    %v1463 = vunpack.c.l.b16 %v1461
    %v1464 = vunpack.c.l.b16 %v1462
    %v1465 = vcvt.s32.f32 %v1463
    %v1466 = vcvt.s32.f32 %v1464
    %v1468 = vsel %vm111, %v1465, 0
    %v1471 = vsel %vm111, %v1466, 0
    %v1474 = vsel %vm111, %v1448, 0
    %1476 = vmatprep.subr.mxu0 0.0
    %1477 = vmatpush1.xpose.msra.mxu0 0.0
    %1478 = vmatprep.subr.mxu0 0.0
    %1479 = vmatpush1.xpose.msra.mxu0 0.0
    %1480 = vmatprep.subr.mxu0 0.0
    %1481 = vmatpush1.xpose.msra.mxu0 0.0
    %1482 = vmatprep.subr.mxu0 0.0
    %1483 = vmatpush1.xpose.msra.mxu0 0.0
    %1484 = vmatprep.subr.mxu0 0.0
    %1485 = vmatpush1.xpose.msra.mxu0 0.0
    %1486 = vmatprep.subr.mxu0 0.0
    %1487 = vmatpush1.xpose.msra.mxu0 0.0
    %1488 = vmatprep.subr.mxu0 0.0
    %1489 = vmatpush1.xpose.msra.mxu0 0.0
    %1490 = vmatprep.subr.mxu0 0.0
    %1491 = vmatpush1.xpose.msra.mxu0 0.0
    %1492 = vmatprep.subr.mxu0 0.0
    %1493 = vmatpush1.xpose.msra.mxu0 0.0
    %1494 = vmatprep.subr.mxu0 0.0
    %1495 = vmatpush1.xpose.msra.mxu0 0.0
    %1496 = vmatprep.subr.mxu0 0.0
    %1497 = vmatpush1.xpose.msra.mxu0 0.0
    %1498 = vmatprep.subr.mxu0 0.0
    %1499 = vmatpush1.xpose.msra.mxu0 0.0
    %1500 = vmatprep.subr.mxu0 0.0
    %1501 = vmatpush1.xpose.msra.mxu0 0.0
    %1502 = vmatprep.subr.mxu0 0.0
    %1503 = vmatpush1.xpose.msra.mxu0 0.0
    %1504 = vmatprep.subr.mxu0 0.0
    %1505 = vmatpush1.xpose.msra.mxu0 0.0
    %1506 = vmatprep.subr.mxu0 0.0
    %1507 = vmatpush1.xpose.msra.mxu0 %v1474
    %1508 = vmatprep.subr.mxu0 0.0
    %1509 = vmatpush2.xpose.msra.mxu0 0.0
    %1510 = vmatprep.subr.mxu0 0.0
    %1511 = vmatpush2.xpose.msra.mxu0 0.0
    %1512 = vmatprep.subr.mxu0 0.0
    %1513 = vmatpush2.xpose.msra.mxu0 0.0
    %1514 = vmatprep.subr.mxu0 0.0
    %1515 = vmatpush2.xpose.msra.mxu0 0.0
    %1516 = vmatprep.subr.mxu0 0.0
    %1517 = vmatpush2.xpose.msra.mxu0 0.0
    %1518 = vmatprep.subr.mxu0 0.0
    %1519 = vmatpush2.xpose.msra.mxu0 0.0
    %1520 = vmatprep.subr.mxu0 0.0
    %1521 = vmatpush2.xpose.msra.mxu0 0.0
    %1522 = vmatprep.subr.mxu0 0.0
    %1523 = vmatpush2.xpose.msra.mxu0 0.0
    %1524 = vmatprep.subr.mxu0 0.0
    %1525 = vmatpush2.xpose.msra.mxu0 0.0
    %1526 = vmatprep.subr.mxu0 0.0
    %1527 = vmatpush2.xpose.msra.mxu0 0.0
    %1528 = vmatprep.subr.mxu0 0.0
    %1529 = vmatpush2.xpose.msra.mxu0 0.0
    %1530 = vmatprep.subr.mxu0 0.0
    %1531 = vmatpush2.xpose.msra.mxu0 0.0
    %1532 = vmatprep.subr.mxu0 0.0
    %1533 = vmatpush2.xpose.msra.mxu0 0.0
    %1534 = vmatprep.subr.mxu0 0.0
    %1535 = vmatpush2.xpose.msra.mxu0 0.0
    %1536 = vmatprep.subr.mxu0 0.0
    %1537 = vmatpush2.xpose.msra.mxu0 0.0
    %1538 = vmatprep.subr.mxu0 0.0
    %1539 = vmatpush2.xpose.msra.mxu0 0.0
    %1540 = vmatprep.mubr.f32.mxu0 0.0
    %1541 = vmatmul.mubr.f32.gmra.mxu0 %v1468
    %v1542 = vpop.f32.mrf.mxu0
    %v1543 = vadd.f32 0.0, %v1542
    %v1544 = vpop.f32.mrf.mxu0
    %1545 = vmatprep.mubr.f32.mxu0 0.0
    %1546 = vmatmul.mubr.f32.gmra.mxu0 %v1471
    %v1547 = vpop.f32.mrf.mxu0
    %v1548 = vadd.f32 0.0, %v1547
    %v1549 = vpop.f32.mrf.mxu0
    %1550 = vdwg.mxu0
    %v1552 = vsel %vm196, %v1543, 0
    %v1555 = vsel %vm196, %v1548, 0
    %1557 = vmatprep.subr.mxu0 0.0
    %1558 = vmatpush1.msra.mxu0 0.0
    %1559 = vmatprep.subr.mxu0 0.0
    %1560 = vmatpush1.msra.mxu0 0.0
    %1561 = vmatprep.subr.mxu0 0.0
    %1562 = vmatpush1.msra.mxu0 0.0
    %1563 = vmatprep.subr.mxu0 0.0
    %1564 = vmatpush1.msra.mxu0 0.0
    %1565 = vmatprep.subr.mxu0 0.0
    %1566 = vmatpush1.msra.mxu0 0.0
    %1567 = vmatprep.subr.mxu0 0.0
    %1568 = vmatpush1.msra.mxu0 0.0
    %1569 = vmatprep.subr.mxu0 0.0
    %1570 = vmatpush1.msra.mxu0 0.0
    %1571 = vmatprep.subr.mxu0 0.0
    %1572 = vmatpush1.msra.mxu0 0.0
    %1573 = vmatprep.subr.mxu0 0.0
    %1574 = vmatpush1.msra.mxu0 0.0
    %1575 = vmatprep.subr.mxu0 0.0
    %1576 = vmatpush1.msra.mxu0 0.0
    %1577 = vmatprep.subr.mxu0 0.0
    %1578 = vmatpush1.msra.mxu0 0.0
    %1579 = vmatprep.subr.mxu0 0.0
    %1580 = vmatpush1.msra.mxu0 0.0
    %1581 = vmatprep.subr.mxu0 0.0
    %1582 = vmatpush1.msra.mxu0 0.0
    %1583 = vmatprep.subr.mxu0 0.0
    %1584 = vmatpush1.msra.mxu0 0.0
    %1585 = vmatprep.subr.mxu0 0.0
    %1586 = vmatpush1.msra.mxu0 0.0
    %1587 = vmatprep.subr.mxu0 0.0
    %1588 = vmatpush1.msra.mxu0 %v61
    %1589 = vmatprep.subr.mxu0 0.0
    %1590 = vmatpush2.msra.mxu0 0.0
    %1591 = vmatprep.subr.mxu0 0.0
    %1592 = vmatpush2.msra.mxu0 0.0
    %1593 = vmatprep.subr.mxu0 0.0
    %1594 = vmatpush2.msra.mxu0 0.0
    %1595 = vmatprep.subr.mxu0 0.0
    %1596 = vmatpush2.msra.mxu0 0.0
    %1597 = vmatprep.subr.mxu0 0.0
    %1598 = vmatpush2.msra.mxu0 0.0
    %1599 = vmatprep.subr.mxu0 0.0
    %1600 = vmatpush2.msra.mxu0 0.0
    %1601 = vmatprep.subr.mxu0 0.0
    %1602 = vmatpush2.msra.mxu0 0.0
    %1603 = vmatprep.subr.mxu0 0.0
    %1604 = vmatpush2.msra.mxu0 0.0
    %1605 = vmatprep.subr.mxu0 0.0
    %1606 = vmatpush2.msra.mxu0 0.0
    %1607 = vmatprep.subr.mxu0 0.0
    %1608 = vmatpush2.msra.mxu0 0.0
    %1609 = vmatprep.subr.mxu0 0.0
    %1610 = vmatpush2.msra.mxu0 0.0
    %1611 = vmatprep.subr.mxu0 0.0
    %1612 = vmatpush2.msra.mxu0 0.0
    %1613 = vmatprep.subr.mxu0 0.0
    %1614 = vmatpush2.msra.mxu0 0.0
    %1615 = vmatprep.subr.mxu0 0.0
    %1616 = vmatpush2.msra.mxu0 0.0
    %1617 = vmatprep.subr.mxu0 0.0
    %1618 = vmatpush2.msra.mxu0 0.0
    %1619 = vmatprep.subr.mxu0 0.0
    %1620 = vmatpush2.msra.mxu0 0.0
    %1621 = vmatprep.mubr.f32.mxu0 0.0
    %1622 = vmatmul.mubr.f32.gmra.mxu0 %v1552
    %v1623 = vpop.f32.mrf.mxu0
    %v1624 = vadd.f32 0.0, %v1623
    %v1625 = vpop.f32.mrf.mxu0
    %1626 = vmatprep.mubr.f32.mxu0 0.0
    %1627 = vmatmul.mubr.f32.gmra.mxu0 %v1555
    %v1628 = vpop.f32.mrf.mxu0
    %v1629 = vadd.f32 0.0, %v1628
    %v1630 = vpop.f32.mrf.mxu0
    %1631 = vdwg.mxu0
    %v1632 = vmul.f32 %v1458, %v1624
    %v1633 = vmul.f32 %v1459, %v1629
    %v1635 = vsel %vm111, %v78, 0
    %1637 = vmatprep.subr.mxu0 0.0
    %1638 = vmatpush1.msra.mxu0 0.0
    %1639 = vmatprep.subr.mxu0 0.0
    %1640 = vmatpush1.msra.mxu0 0.0
    %1641 = vmatprep.subr.mxu0 0.0
    %1642 = vmatpush1.msra.mxu0 0.0
    %1643 = vmatprep.subr.mxu0 0.0
    %1644 = vmatpush1.msra.mxu0 0.0
    %1645 = vmatprep.subr.mxu0 0.0
    %1646 = vmatpush1.msra.mxu0 0.0
    %1647 = vmatprep.subr.mxu0 0.0
    %1648 = vmatpush1.msra.mxu0 0.0
    %1649 = vmatprep.subr.mxu0 0.0
    %1650 = vmatpush1.msra.mxu0 0.0
    %1651 = vmatprep.subr.mxu0 0.0
    %1652 = vmatpush1.msra.mxu0 0.0
    %1653 = vmatprep.subr.mxu0 0.0
    %1654 = vmatpush1.msra.mxu0 0.0
    %1655 = vmatprep.subr.mxu0 0.0
    %1656 = vmatpush1.msra.mxu0 0.0
    %1657 = vmatprep.subr.mxu0 0.0
    %1658 = vmatpush1.msra.mxu0 0.0
    %1659 = vmatprep.subr.mxu0 0.0
    %1660 = vmatpush1.msra.mxu0 0.0
    %1661 = vmatprep.subr.mxu0 0.0
    %1662 = vmatpush1.msra.mxu0 0.0
    %1663 = vmatprep.subr.mxu0 0.0
    %1664 = vmatpush1.msra.mxu0 0.0
    %1665 = vmatprep.subr.mxu0 0.0
    %1666 = vmatpush1.msra.mxu0 %v1633
    %1667 = vmatprep.subr.mxu0 0.0
    %1668 = vmatpush1.msra.mxu0 %v1632
    %1669 = vmatprep.subr.mxu0 0.0
    %1670 = vmatpush2.msra.mxu0 0.0
    %1671 = vmatprep.subr.mxu0 0.0
    %1672 = vmatpush2.msra.mxu0 0.0
    %1673 = vmatprep.subr.mxu0 0.0
    %1674 = vmatpush2.msra.mxu0 0.0
    %1675 = vmatprep.subr.mxu0 0.0
    %1676 = vmatpush2.msra.mxu0 0.0
    %1677 = vmatprep.subr.mxu0 0.0
    %1678 = vmatpush2.msra.mxu0 0.0
    %1679 = vmatprep.subr.mxu0 0.0
    %1680 = vmatpush2.msra.mxu0 0.0
    %1681 = vmatprep.subr.mxu0 0.0
    %1682 = vmatpush2.msra.mxu0 0.0
    %1683 = vmatprep.subr.mxu0 0.0
    %1684 = vmatpush2.msra.mxu0 0.0
    %1685 = vmatprep.subr.mxu0 0.0
    %1686 = vmatpush2.msra.mxu0 0.0
    %1687 = vmatprep.subr.mxu0 0.0
    %1688 = vmatpush2.msra.mxu0 0.0
    %1689 = vmatprep.subr.mxu0 0.0
    %1690 = vmatpush2.msra.mxu0 0.0
    %1691 = vmatprep.subr.mxu0 0.0
    %1692 = vmatpush2.msra.mxu0 0.0
    %1693 = vmatprep.subr.mxu0 0.0
    %1694 = vmatpush2.msra.mxu0 0.0
    %1695 = vmatprep.subr.mxu0 0.0
    %1696 = vmatpush2.msra.mxu0 0.0
    %1697 = vmatprep.subr.mxu0 0.0
    %1698 = vmatpush2.msra.mxu0 0.0
    %1699 = vmatprep.subr.mxu0 0.0
    %1700 = vmatpush2.msra.mxu0 0.0
    %1701 = vmatprep.mubr.f32.mxu0 0.0
    %1702 = vmatmul.mubr.f32.gmra.mxu0 %v1635
    %v1703 = vpop.f32.mrf.mxu0
    %v1704 = vadd.f32 0.0, %v1703
    %v1705 = vpop.f32.mrf.mxu0
    %1706 = vdwg.mxu0
    %v1707 = vadd.f32 %v1436, %v1704
    %s1708 = sadd.s32 %s280, 6
    %s1709 = smul.u32 %s1708, 2
    %s1710 = sld [smem:[#allocation3 + %s1709]]
    %s1711 = sadd.s32 %s1709, 1
    %s1712 = sld [smem:[#allocation3 + %s1711]]
    %v1713 = vstv %s1710
    %vm1714 = vcmp.eq.s32.totalorder %v66, %v1713
    %s1715 = sadd.s32 %s1710, 1
    %v1716 = vstv %s1715
    %vm1717 = vcmp.eq.s32.totalorder %v66, %v1716
    %vm1718 = vmor %vm1714, %vm1717
    %v1719 = vsel %vm1718, 0.5, 0.0
    %v1720 = vstv %s1712
    %vm1721 = vcmp.eq.s32.totalorder %v59, %v1720
    %vm1722 = vcmp.eq.s32.totalorder %v60, %v1720
    %s1723 = sadd.s32 %s1712, 1
    %v1724 = vstv %s1723
    %vm1725 = vcmp.eq.s32.totalorder %v59, %v1724
    %vm1726 = vcmp.eq.s32.totalorder %v60, %v1724
    %vm1727 = vmor %vm1721, %vm1725
    %vm1728 = vmor %vm1722, %vm1726
    %v1729 = vsel %vm1727, 0.5, 0.0
    %v1730 = vsel %vm1728, 0.5, 0.0
    %s1731 = scalar_lea.vmem [#allocation9], 48
    %v1732 = vld [vmem:[%s1731] sm:$0xf]
    %v1733 = vld [vmem:[%s1731 + $0x4] sm:$0xf]
    %v1734 = vunpack.c.l.b16 %v1732
    %v1735 = vunpack.c.l.b16 %v1733
    %v1736 = vcvt.s32.f32 %v1734
    %v1737 = vcvt.s32.f32 %v1735
    %v1739 = vsel %vm111, %v1736, 0
    %v1742 = vsel %vm111, %v1737, 0
    %v1745 = vsel %vm111, %v1719, 0
    %1747 = vmatprep.subr.mxu0 0.0
    %1748 = vmatpush1.xpose.msra.mxu0 0.0
    %1749 = vmatprep.subr.mxu0 0.0
    %1750 = vmatpush1.xpose.msra.mxu0 0.0
    %1751 = vmatprep.subr.mxu0 0.0
    %1752 = vmatpush1.xpose.msra.mxu0 0.0
    %1753 = vmatprep.subr.mxu0 0.0
    %1754 = vmatpush1.xpose.msra.mxu0 0.0
    %1755 = vmatprep.subr.mxu0 0.0
    %1756 = vmatpush1.xpose.msra.mxu0 0.0
    %1757 = vmatprep.subr.mxu0 0.0
    %1758 = vmatpush1.xpose.msra.mxu0 0.0
    %1759 = vmatprep.subr.mxu0 0.0
    %1760 = vmatpush1.xpose.msra.mxu0 0.0
    %1761 = vmatprep.subr.mxu0 0.0
    %1762 = vmatpush1.xpose.msra.mxu0 0.0
    %1763 = vmatprep.subr.mxu0 0.0
    %1764 = vmatpush1.xpose.msra.mxu0 0.0
    %1765 = vmatprep.subr.mxu0 0.0
    %1766 = vmatpush1.xpose.msra.mxu0 0.0
    %1767 = vmatprep.subr.mxu0 0.0
    %1768 = vmatpush1.xpose.msra.mxu0 0.0
    %1769 = vmatprep.subr.mxu0 0.0
    %1770 = vmatpush1.xpose.msra.mxu0 0.0
    %1771 = vmatprep.subr.mxu0 0.0
    %1772 = vmatpush1.xpose.msra.mxu0 0.0
    %1773 = vmatprep.subr.mxu0 0.0
    %1774 = vmatpush1.xpose.msra.mxu0 0.0
    %1775 = vmatprep.subr.mxu0 0.0
    %1776 = vmatpush1.xpose.msra.mxu0 0.0
    %1777 = vmatprep.subr.mxu0 0.0
    %1778 = vmatpush1.xpose.msra.mxu0 %v1745
    %1779 = vmatprep.subr.mxu0 0.0
    %1780 = vmatpush2.xpose.msra.mxu0 0.0
    %1781 = vmatprep.subr.mxu0 0.0
    %1782 = vmatpush2.xpose.msra.mxu0 0.0
    %1783 = vmatprep.subr.mxu0 0.0
    %1784 = vmatpush2.xpose.msra.mxu0 0.0
    %1785 = vmatprep.subr.mxu0 0.0
    %1786 = vmatpush2.xpose.msra.mxu0 0.0
    %1787 = vmatprep.subr.mxu0 0.0
    %1788 = vmatpush2.xpose.msra.mxu0 0.0
    %1789 = vmatprep.subr.mxu0 0.0
    %1790 = vmatpush2.xpose.msra.mxu0 0.0
    %1791 = vmatprep.subr.mxu0 0.0
    %1792 = vmatpush2.xpose.msra.mxu0 0.0
    %1793 = vmatprep.subr.mxu0 0.0
    %1794 = vmatpush2.xpose.msra.mxu0 0.0
    %1795 = vmatprep.subr.mxu0 0.0
    %1796 = vmatpush2.xpose.msra.mxu0 0.0
    %1797 = vmatprep.subr.mxu0 0.0
    %1798 = vmatpush2.xpose.msra.mxu0 0.0
    %1799 = vmatprep.subr.mxu0 0.0
    %1800 = vmatpush2.xpose.msra.mxu0 0.0
    %1801 = vmatprep.subr.mxu0 0.0
    %1802 = vmatpush2.xpose.msra.mxu0 0.0
    %1803 = vmatprep.subr.mxu0 0.0
    %1804 = vmatpush2.xpose.msra.mxu0 0.0
    %1805 = vmatprep.subr.mxu0 0.0
    %1806 = vmatpush2.xpose.msra.mxu0 0.0
    %1807 = vmatprep.subr.mxu0 0.0
    %1808 = vmatpush2.xpose.msra.mxu0 0.0
    %1809 = vmatprep.subr.mxu0 0.0
    %1810 = vmatpush2.xpose.msra.mxu0 0.0
    %1811 = vmatprep.mubr.f32.mxu0 0.0
    %1812 = vmatmul.mubr.f32.gmra.mxu0 %v1739
    %v1813 = vpop.f32.mrf.mxu0
    %v1814 = vadd.f32 0.0, %v1813
    %v1815 = vpop.f32.mrf.mxu0
    %1816 = vmatprep.mubr.f32.mxu0 0.0
    %1817 = vmatmul.mubr.f32.gmra.mxu0 %v1742
    %v1818 = vpop.f32.mrf.mxu0
    %v1819 = vadd.f32 0.0, %v1818
    %v1820 = vpop.f32.mrf.mxu0
    %1821 = vdwg.mxu0
    %v1823 = vsel %vm196, %v1814, 0
    %v1826 = vsel %vm196, %v1819, 0
    %1828 = vmatprep.subr.mxu0 0.0
    %1829 = vmatpush1.msra.mxu0 0.0
    %1830 = vmatprep.subr.mxu0 0.0
    %1831 = vmatpush1.msra.mxu0 0.0
    %1832 = vmatprep.subr.mxu0 0.0
    %1833 = vmatpush1.msra.mxu0 0.0
    %1834 = vmatprep.subr.mxu0 0.0
    %1835 = vmatpush1.msra.mxu0 0.0
    %1836 = vmatprep.subr.mxu0 0.0
    %1837 = vmatpush1.msra.mxu0 0.0
    %1838 = vmatprep.subr.mxu0 0.0
    %1839 = vmatpush1.msra.mxu0 0.0
    %1840 = vmatprep.subr.mxu0 0.0
    %1841 = vmatpush1.msra.mxu0 0.0
    %1842 = vmatprep.subr.mxu0 0.0
    %1843 = vmatpush1.msra.mxu0 0.0
    %1844 = vmatprep.subr.mxu0 0.0
    %1845 = vmatpush1.msra.mxu0 0.0
    %1846 = vmatprep.subr.mxu0 0.0
    %1847 = vmatpush1.msra.mxu0 0.0
    %1848 = vmatprep.subr.mxu0 0.0
    %1849 = vmatpush1.msra.mxu0 0.0
    %1850 = vmatprep.subr.mxu0 0.0
    %1851 = vmatpush1.msra.mxu0 0.0
    %1852 = vmatprep.subr.mxu0 0.0
    %1853 = vmatpush1.msra.mxu0 0.0
    %1854 = vmatprep.subr.mxu0 0.0
    %1855 = vmatpush1.msra.mxu0 0.0
    %1856 = vmatprep.subr.mxu0 0.0
    %1857 = vmatpush1.msra.mxu0 0.0
    %1858 = vmatprep.subr.mxu0 0.0
    %1859 = vmatpush1.msra.mxu0 %v61
    %1860 = vmatprep.subr.mxu0 0.0
    %1861 = vmatpush2.msra.mxu0 0.0
    %1862 = vmatprep.subr.mxu0 0.0
    %1863 = vmatpush2.msra.mxu0 0.0
    %1864 = vmatprep.subr.mxu0 0.0
    %1865 = vmatpush2.msra.mxu0 0.0
    %1866 = vmatprep.subr.mxu0 0.0
    %1867 = vmatpush2.msra.mxu0 0.0
    %1868 = vmatprep.subr.mxu0 0.0
    %1869 = vmatpush2.msra.mxu0 0.0
    %1870 = vmatprep.subr.mxu0 0.0
    %1871 = vmatpush2.msra.mxu0 0.0
    %1872 = vmatprep.subr.mxu0 0.0
    %1873 = vmatpush2.msra.mxu0 0.0
    %1874 = vmatprep.subr.mxu0 0.0
    %1875 = vmatpush2.msra.mxu0 0.0
    %1876 = vmatprep.subr.mxu0 0.0
    %1877 = vmatpush2.msra.mxu0 0.0
    %1878 = vmatprep.subr.mxu0 0.0
    %1879 = vmatpush2.msra.mxu0 0.0
    %1880 = vmatprep.subr.mxu0 0.0
    %1881 = vmatpush2.msra.mxu0 0.0
    %1882 = vmatprep.subr.mxu0 0.0
    %1883 = vmatpush2.msra.mxu0 0.0
    %1884 = vmatprep.subr.mxu0 0.0
    %1885 = vmatpush2.msra.mxu0 0.0
    %1886 = vmatprep.subr.mxu0 0.0
    %1887 = vmatpush2.msra.mxu0 0.0
    %1888 = vmatprep.subr.mxu0 0.0
    %1889 = vmatpush2.msra.mxu0 0.0
    %1890 = vmatprep.subr.mxu0 0.0
    %1891 = vmatpush2.msra.mxu0 0.0
    %1892 = vmatprep.mubr.f32.mxu0 0.0
    %1893 = vmatmul.mubr.f32.gmra.mxu0 %v1823
    %v1894 = vpop.f32.mrf.mxu0
    %v1895 = vadd.f32 0.0, %v1894
    %v1896 = vpop.f32.mrf.mxu0
    %1897 = vmatprep.mubr.f32.mxu0 0.0
    %1898 = vmatmul.mubr.f32.gmra.mxu0 %v1826
    %v1899 = vpop.f32.mrf.mxu0
    %v1900 = vadd.f32 0.0, %v1899
    %v1901 = vpop.f32.mrf.mxu0
    %1902 = vdwg.mxu0
    %v1903 = vmul.f32 %v1729, %v1895
    %v1904 = vmul.f32 %v1730, %v1900
    %v1906 = vsel %vm111, %v80, 0
    %1908 = vmatprep.subr.mxu0 0.0
    %1909 = vmatpush1.msra.mxu0 0.0
    %1910 = vmatprep.subr.mxu0 0.0
    %1911 = vmatpush1.msra.mxu0 0.0
    %1912 = vmatprep.subr.mxu0 0.0
    %1913 = vmatpush1.msra.mxu0 0.0
    %1914 = vmatprep.subr.mxu0 0.0
    %1915 = vmatpush1.msra.mxu0 0.0
    %1916 = vmatprep.subr.mxu0 0.0
    %1917 = vmatpush1.msra.mxu0 0.0
    %1918 = vmatprep.subr.mxu0 0.0
    %1919 = vmatpush1.msra.mxu0 0.0
    %1920 = vmatprep.subr.mxu0 0.0
    %1921 = vmatpush1.msra.mxu0 0.0
    %1922 = vmatprep.subr.mxu0 0.0
    %1923 = vmatpush1.msra.mxu0 0.0
    %1924 = vmatprep.subr.mxu0 0.0
    %1925 = vmatpush1.msra.mxu0 0.0
    %1926 = vmatprep.subr.mxu0 0.0
    %1927 = vmatpush1.msra.mxu0 0.0
    %1928 = vmatprep.subr.mxu0 0.0
    %1929 = vmatpush1.msra.mxu0 0.0
    %1930 = vmatprep.subr.mxu0 0.0
    %1931 = vmatpush1.msra.mxu0 0.0
    %1932 = vmatprep.subr.mxu0 0.0
    %1933 = vmatpush1.msra.mxu0 0.0
    %1934 = vmatprep.subr.mxu0 0.0
    %1935 = vmatpush1.msra.mxu0 0.0
    %1936 = vmatprep.subr.mxu0 0.0
    %1937 = vmatpush1.msra.mxu0 %v1904
    %1938 = vmatprep.subr.mxu0 0.0
    %1939 = vmatpush1.msra.mxu0 %v1903
    %1940 = vmatprep.subr.mxu0 0.0
    %1941 = vmatpush2.msra.mxu0 0.0
    %1942 = vmatprep.subr.mxu0 0.0
    %1943 = vmatpush2.msra.mxu0 0.0
    %1944 = vmatprep.subr.mxu0 0.0
    %1945 = vmatpush2.msra.mxu0 0.0
    %1946 = vmatprep.subr.mxu0 0.0
    %1947 = vmatpush2.msra.mxu0 0.0
    %1948 = vmatprep.subr.mxu0 0.0
    %1949 = vmatpush2.msra.mxu0 0.0
    %1950 = vmatprep.subr.mxu0 0.0
    %1951 = vmatpush2.msra.mxu0 0.0
    %1952 = vmatprep.subr.mxu0 0.0
    %1953 = vmatpush2.msra.mxu0 0.0
    %1954 = vmatprep.subr.mxu0 0.0
    %1955 = vmatpush2.msra.mxu0 0.0
    %1956 = vmatprep.subr.mxu0 0.0
    %1957 = vmatpush2.msra.mxu0 0.0
    %1958 = vmatprep.subr.mxu0 0.0
    %1959 = vmatpush2.msra.mxu0 0.0
    %1960 = vmatprep.subr.mxu0 0.0
    %1961 = vmatpush2.msra.mxu0 0.0
    %1962 = vmatprep.subr.mxu0 0.0
    %1963 = vmatpush2.msra.mxu0 0.0
    %1964 = vmatprep.subr.mxu0 0.0
    %1965 = vmatpush2.msra.mxu0 0.0
    %1966 = vmatprep.subr.mxu0 0.0
    %1967 = vmatpush2.msra.mxu0 0.0
    %1968 = vmatprep.subr.mxu0 0.0
    %1969 = vmatpush2.msra.mxu0 0.0
    %1970 = vmatprep.subr.mxu0 0.0
    %1971 = vmatpush2.msra.mxu0 0.0
    %1972 = vmatprep.mubr.f32.mxu0 0.0
    %1973 = vmatmul.mubr.f32.gmra.mxu0 %v1906
    %v1974 = vpop.f32.mrf.mxu0
    %v1975 = vadd.f32 0.0, %v1974
    %v1976 = vpop.f32.mrf.mxu0
    %1977 = vdwg.mxu0
    %v1978 = vadd.f32 %v1707, %v1975
    %s1979 = sadd.s32 %s280, 7
    %s1980 = smul.u32 %s1979, 2
    %s1981 = sld [smem:[#allocation3 + %s1980]]
    %s1982 = sadd.s32 %s1980, 1
    %s1983 = sld [smem:[#allocation3 + %s1982]]
    %v1984 = vstv %s1981
    %vm1985 = vcmp.eq.s32.totalorder %v66, %v1984
    %s1986 = sadd.s32 %s1981, 1
    %v1987 = vstv %s1986
    %vm1988 = vcmp.eq.s32.totalorder %v66, %v1987
    %vm1989 = vmor %vm1985, %vm1988
    %v1990 = vsel %vm1989, 0.5, 0.0
    %v1991 = vstv %s1983
    %vm1992 = vcmp.eq.s32.totalorder %v59, %v1991
    %vm1993 = vcmp.eq.s32.totalorder %v60, %v1991
    %s1994 = sadd.s32 %s1983, 1
    %v1995 = vstv %s1994
    %vm1996 = vcmp.eq.s32.totalorder %v59, %v1995
    %vm1997 = vcmp.eq.s32.totalorder %v60, %v1995
    %vm1998 = vmor %vm1992, %vm1996
    %vm1999 = vmor %vm1993, %vm1997
    %v2000 = vsel %vm1998, 0.5, 0.0
    %v2001 = vsel %vm1999, 0.5, 0.0
    %s2002 = scalar_lea.vmem [#allocation9], 56
    %v2003 = vld [vmem:[%s2002] sm:$0xf]
    %v2004 = vld [vmem:[%s2002 + $0x4] sm:$0xf]
    %v2005 = vunpack.c.l.b16 %v2003
    %v2006 = vunpack.c.l.b16 %v2004
    %v2007 = vcvt.s32.f32 %v2005
    %v2008 = vcvt.s32.f32 %v2006
    %v2010 = vsel %vm111, %v2007, 0
    %v2013 = vsel %vm111, %v2008, 0
    %v2016 = vsel %vm111, %v1990, 0
    %2018 = vmatprep.subr.mxu0 0.0
    %2019 = vmatpush1.xpose.msra.mxu0 0.0
    %2020 = vmatprep.subr.mxu0 0.0
    %2021 = vmatpush1.xpose.msra.mxu0 0.0
    %2022 = vmatprep.subr.mxu0 0.0
    %2023 = vmatpush1.xpose.msra.mxu0 0.0
    %2024 = vmatprep.subr.mxu0 0.0
    %2025 = vmatpush1.xpose.msra.mxu0 0.0
    %2026 = vmatprep.subr.mxu0 0.0
    %2027 = vmatpush1.xpose.msra.mxu0 0.0
    %2028 = vmatprep.subr.mxu0 0.0
    %2029 = vmatpush1.xpose.msra.mxu0 0.0
    %2030 = vmatprep.subr.mxu0 0.0
    %2031 = vmatpush1.xpose.msra.mxu0 0.0
    %2032 = vmatprep.subr.mxu0 0.0
    %2033 = vmatpush1.xpose.msra.mxu0 0.0
    %2034 = vmatprep.subr.mxu0 0.0
    %2035 = vmatpush1.xpose.msra.mxu0 0.0
    %2036 = vmatprep.subr.mxu0 0.0
    %2037 = vmatpush1.xpose.msra.mxu0 0.0
    %2038 = vmatprep.subr.mxu0 0.0
    %2039 = vmatpush1.xpose.msra.mxu0 0.0
    %2040 = vmatprep.subr.mxu0 0.0
    %2041 = vmatpush1.xpose.msra.mxu0 0.0
    %2042 = vmatprep.subr.mxu0 0.0
    %2043 = vmatpush1.xpose.msra.mxu0 0.0
    %2044 = vmatprep.subr.mxu0 0.0
    %2045 = vmatpush1.xpose.msra.mxu0 0.0
    %2046 = vmatprep.subr.mxu0 0.0
    %2047 = vmatpush1.xpose.msra.mxu0 0.0
    %2048 = vmatprep.subr.mxu0 0.0
    %2049 = vmatpush1.xpose.msra.mxu0 %v2016
    %2050 = vmatprep.subr.mxu0 0.0
    %2051 = vmatpush2.xpose.msra.mxu0 0.0
    %2052 = vmatprep.subr.mxu0 0.0
    %2053 = vmatpush2.xpose.msra.mxu0 0.0
    %2054 = vmatprep.subr.mxu0 0.0
    %2055 = vmatpush2.xpose.msra.mxu0 0.0
    %2056 = vmatprep.subr.mxu0 0.0
    %2057 = vmatpush2.xpose.msra.mxu0 0.0
    %2058 = vmatprep.subr.mxu0 0.0
    %2059 = vmatpush2.xpose.msra.mxu0 0.0
    %2060 = vmatprep.subr.mxu0 0.0
    %2061 = vmatpush2.xpose.msra.mxu0 0.0
    %2062 = vmatprep.subr.mxu0 0.0
    %2063 = vmatpush2.xpose.msra.mxu0 0.0
    %2064 = vmatprep.subr.mxu0 0.0
    %2065 = vmatpush2.xpose.msra.mxu0 0.0
    %2066 = vmatprep.subr.mxu0 0.0
    %2067 = vmatpush2.xpose.msra.mxu0 0.0
    %2068 = vmatprep.subr.mxu0 0.0
    %2069 = vmatpush2.xpose.msra.mxu0 0.0
    %2070 = vmatprep.subr.mxu0 0.0
    %2071 = vmatpush2.xpose.msra.mxu0 0.0
    %2072 = vmatprep.subr.mxu0 0.0
    %2073 = vmatpush2.xpose.msra.mxu0 0.0
    %2074 = vmatprep.subr.mxu0 0.0
    %2075 = vmatpush2.xpose.msra.mxu0 0.0
    %2076 = vmatprep.subr.mxu0 0.0
    %2077 = vmatpush2.xpose.msra.mxu0 0.0
    %2078 = vmatprep.subr.mxu0 0.0
    %2079 = vmatpush2.xpose.msra.mxu0 0.0
    %2080 = vmatprep.subr.mxu0 0.0
    %2081 = vmatpush2.xpose.msra.mxu0 0.0
    %2082 = vmatprep.mubr.f32.mxu0 0.0
    %2083 = vmatmul.mubr.f32.gmra.mxu0 %v2010
    %v2084 = vpop.f32.mrf.mxu0
    %v2085 = vadd.f32 0.0, %v2084
    %v2086 = vpop.f32.mrf.mxu0
    %2087 = vmatprep.mubr.f32.mxu0 0.0
    %2088 = vmatmul.mubr.f32.gmra.mxu0 %v2013
    %v2089 = vpop.f32.mrf.mxu0
    %v2090 = vadd.f32 0.0, %v2089
    %v2091 = vpop.f32.mrf.mxu0
    %2092 = vdwg.mxu0
    %v2094 = vsel %vm196, %v2085, 0
    %v2097 = vsel %vm196, %v2090, 0
    %2099 = vmatprep.subr.mxu0 0.0
    %2100 = vmatpush1.msra.mxu0 0.0
    %2101 = vmatprep.subr.mxu0 0.0
    %2102 = vmatpush1.msra.mxu0 0.0
    %2103 = vmatprep.subr.mxu0 0.0
    %2104 = vmatpush1.msra.mxu0 0.0
    %2105 = vmatprep.subr.mxu0 0.0
    %2106 = vmatpush1.msra.mxu0 0.0
    %2107 = vmatprep.subr.mxu0 0.0
    %2108 = vmatpush1.msra.mxu0 0.0
    %2109 = vmatprep.subr.mxu0 0.0
    %2110 = vmatpush1.msra.mxu0 0.0
    %2111 = vmatprep.subr.mxu0 0.0
    %2112 = vmatpush1.msra.mxu0 0.0
    %2113 = vmatprep.subr.mxu0 0.0
    %2114 = vmatpush1.msra.mxu0 0.0
    %2115 = vmatprep.subr.mxu0 0.0
    %2116 = vmatpush1.msra.mxu0 0.0
    %2117 = vmatprep.subr.mxu0 0.0
    %2118 = vmatpush1.msra.mxu0 0.0
    %2119 = vmatprep.subr.mxu0 0.0
    %2120 = vmatpush1.msra.mxu0 0.0
    %2121 = vmatprep.subr.mxu0 0.0
    %2122 = vmatpush1.msra.mxu0 0.0
    %2123 = vmatprep.subr.mxu0 0.0
    %2124 = vmatpush1.msra.mxu0 0.0
    %2125 = vmatprep.subr.mxu0 0.0
    %2126 = vmatpush1.msra.mxu0 0.0
    %2127 = vmatprep.subr.mxu0 0.0
    %2128 = vmatpush1.msra.mxu0 0.0
    %2129 = vmatprep.subr.mxu0 0.0
    %2130 = vmatpush1.msra.mxu0 %v61
    %2131 = vmatprep.subr.mxu0 0.0
    %2132 = vmatpush2.msra.mxu0 0.0
    %2133 = vmatprep.subr.mxu0 0.0
    %2134 = vmatpush2.msra.mxu0 0.0
    %2135 = vmatprep.subr.mxu0 0.0
    %2136 = vmatpush2.msra.mxu0 0.0
    %2137 = vmatprep.subr.mxu0 0.0
    %2138 = vmatpush2.msra.mxu0 0.0
    %2139 = vmatprep.subr.mxu0 0.0
    %2140 = vmatpush2.msra.mxu0 0.0
    %2141 = vmatprep.subr.mxu0 0.0
    %2142 = vmatpush2.msra.mxu0 0.0
    %2143 = vmatprep.subr.mxu0 0.0
    %2144 = vmatpush2.msra.mxu0 0.0
    %2145 = vmatprep.subr.mxu0 0.0
    %2146 = vmatpush2.msra.mxu0 0.0
    %2147 = vmatprep.subr.mxu0 0.0
    %2148 = vmatpush2.msra.mxu0 0.0
    %2149 = vmatprep.subr.mxu0 0.0
    %2150 = vmatpush2.msra.mxu0 0.0
    %2151 = vmatprep.subr.mxu0 0.0
    %2152 = vmatpush2.msra.mxu0 0.0
    %2153 = vmatprep.subr.mxu0 0.0
    %2154 = vmatpush2.msra.mxu0 0.0
    %2155 = vmatprep.subr.mxu0 0.0
    %2156 = vmatpush2.msra.mxu0 0.0
    %2157 = vmatprep.subr.mxu0 0.0
    %2158 = vmatpush2.msra.mxu0 0.0
    %2159 = vmatprep.subr.mxu0 0.0
    %2160 = vmatpush2.msra.mxu0 0.0
    %2161 = vmatprep.subr.mxu0 0.0
    %2162 = vmatpush2.msra.mxu0 0.0
    %2163 = vmatprep.mubr.f32.mxu0 0.0
    %2164 = vmatmul.mubr.f32.gmra.mxu0 %v2094
    %v2165 = vpop.f32.mrf.mxu0
    %v2166 = vadd.f32 0.0, %v2165
    %v2167 = vpop.f32.mrf.mxu0
    %2168 = vmatprep.mubr.f32.mxu0 0.0
    %2169 = vmatmul.mubr.f32.gmra.mxu0 %v2097
    %v2170 = vpop.f32.mrf.mxu0
    %v2171 = vadd.f32 0.0, %v2170
    %v2172 = vpop.f32.mrf.mxu0
    %2173 = vdwg.mxu0
    %v2174 = vmul.f32 %v2000, %v2166
    %v2175 = vmul.f32 %v2001, %v2171
    %v2177 = vsel %vm111, %v82, 0
    %2179 = vmatprep.subr.mxu0 0.0
    %2180 = vmatpush1.msra.mxu0 0.0
    %2181 = vmatprep.subr.mxu0 0.0
    %2182 = vmatpush1.msra.mxu0 0.0
    %2183 = vmatprep.subr.mxu0 0.0
    %2184 = vmatpush1.msra.mxu0 0.0
    %2185 = vmatprep.subr.mxu0 0.0
    %2186 = vmatpush1.msra.mxu0 0.0
    %2187 = vmatprep.subr.mxu0 0.0
    %2188 = vmatpush1.msra.mxu0 0.0
    %2189 = vmatprep.subr.mxu0 0.0
    %2190 = vmatpush1.msra.mxu0 0.0
    %2191 = vmatprep.subr.mxu0 0.0
    %2192 = vmatpush1.msra.mxu0 0.0
    %2193 = vmatprep.subr.mxu0 0.0
    %2194 = vmatpush1.msra.mxu0 0.0
    %2195 = vmatprep.subr.mxu0 0.0
    %2196 = vmatpush1.msra.mxu0 0.0
    %2197 = vmatprep.subr.mxu0 0.0
    %2198 = vmatpush1.msra.mxu0 0.0
    %2199 = vmatprep.subr.mxu0 0.0
    %2200 = vmatpush1.msra.mxu0 0.0
    %2201 = vmatprep.subr.mxu0 0.0
    %2202 = vmatpush1.msra.mxu0 0.0
    %2203 = vmatprep.subr.mxu0 0.0
    %2204 = vmatpush1.msra.mxu0 0.0
    %2205 = vmatprep.subr.mxu0 0.0
    %2206 = vmatpush1.msra.mxu0 0.0
    %2207 = vmatprep.subr.mxu0 0.0
    %2208 = vmatpush1.msra.mxu0 %v2175
    %2209 = vmatprep.subr.mxu0 0.0
    %2210 = vmatpush1.msra.mxu0 %v2174
    %2211 = vmatprep.subr.mxu0 0.0
    %2212 = vmatpush2.msra.mxu0 0.0
    %2213 = vmatprep.subr.mxu0 0.0
    %2214 = vmatpush2.msra.mxu0 0.0
    %2215 = vmatprep.subr.mxu0 0.0
    %2216 = vmatpush2.msra.mxu0 0.0
    %2217 = vmatprep.subr.mxu0 0.0
    %2218 = vmatpush2.msra.mxu0 0.0
    %2219 = vmatprep.subr.mxu0 0.0
    %2220 = vmatpush2.msra.mxu0 0.0
    %2221 = vmatprep.subr.mxu0 0.0
    %2222 = vmatpush2.msra.mxu0 0.0
    %2223 = vmatprep.subr.mxu0 0.0
    %2224 = vmatpush2.msra.mxu0 0.0
    %2225 = vmatprep.subr.mxu0 0.0
    %2226 = vmatpush2.msra.mxu0 0.0
    %2227 = vmatprep.subr.mxu0 0.0
    %2228 = vmatpush2.msra.mxu0 0.0
    %2229 = vmatprep.subr.mxu0 0.0
    %2230 = vmatpush2.msra.mxu0 0.0
    %2231 = vmatprep.subr.mxu0 0.0
    %2232 = vmatpush2.msra.mxu0 0.0
    %2233 = vmatprep.subr.mxu0 0.0
    %2234 = vmatpush2.msra.mxu0 0.0
    %2235 = vmatprep.subr.mxu0 0.0
    %2236 = vmatpush2.msra.mxu0 0.0
    %2237 = vmatprep.subr.mxu0 0.0
    %2238 = vmatpush2.msra.mxu0 0.0
    %2239 = vmatprep.subr.mxu0 0.0
    %2240 = vmatpush2.msra.mxu0 0.0
    %2241 = vmatprep.subr.mxu0 0.0
    %2242 = vmatpush2.msra.mxu0 0.0
    %2243 = vmatprep.mubr.f32.mxu0 0.0
    %2244 = vmatmul.mubr.f32.gmra.mxu0 %v2177
    %v2245 = vpop.f32.mrf.mxu0
    %v2246 = vadd.f32 0.0, %v2245
    %v2247 = vpop.f32.mrf.mxu0
    %2248 = vdwg.mxu0
    %v2249 = vadd.f32 %v1978, %v2246
    %v2250 = vround.ne.pseudo %v2249
    %vm2251 = vcmask 523264
    %2252 = vst.msk [vmem:[#allocation10] sm:$0xff] %vm2251, %v2250
    // Predicated region
    $region26: #{tpu_custom_call.1} parent=1 // pred_check
      _
    $region27: #{tpu_custom_call.1} parent=1 // pred_check_branch
      %2254 = sbr.rel (0) target = $region29
    $region28: #{tpu_custom_call.1} parent=1 // pred_region
      %s2256 = ssub.s32 128, 128
      %2257 = vsyncadd [#allocation6], %s2256
      %s2259 = sshll.u32 [#allocation10], 4
      %s2260 = int_to_ptr.vmem [resolvable:$true] %s2259
      %2262 = dma.vmem_to_hbm [thread:$0]  %s2260, 128, %s4, [#allocation6]
    $region29: #{tpu_custom_call.1} parent=1 // pred_fallthru
      _
    // Predicated region
    $region30: #{tpu_custom_call.1} parent=1 // pred_check
      _
    $region31: #{tpu_custom_call.1} parent=1 // pred_check_branch
      %2264 = sbr.rel (0) target = $region33
    $region32: #{tpu_custom_call.1} parent=1 // pred_region
      %2265 = dma.done [#allocation6], 128
    $region33: #{tpu_custom_call.1} parent=1 // pred_fallthru
      _
    %2266 = vsyncpa [#allocation5], 1
    %2267 = vsyncpa [#allocation8], 1
    %2268 = vsyncpa [#allocation6], 1

</llo_original>
